<compile_context>
chip_gen: v7x
topology: tpu7x:2x2x1
jax: 0.10.0
libtpu: 0.0.40
codegen_flags: <defaults>
</compile_context>

<pallas_src>
import jax
import jax.numpy as jnp
from jax import lax
from jax.experimental import pallas as pl
from jax.experimental.pallas import tpu as pltpu

_EPS = 1e-5  # nn.BatchNorm2d default eps


def _make_resblock_kernel(N, H, W, Cin, Cout):
    WC = W * Cout
    inv_cnt = 1.0 / float(N * H * W)

    def kernel(x_ref, su_ref, sd_ref,
               w1u_ref, w1cs_ref, w1d_ref,
               w2u_ref, w2c_ref, w2d_ref,
               fold_ref,
               b1_ref, g1_ref, bt1_ref,
               b2_ref, g2_ref, bt2_ref,
               bs_ref, gs_ref, bts_ref,
               out_ref):
        dot = lambda a, b: jnp.dot(a, b, preferred_element_type=jnp.float32)

        x = x_ref[...]          # (N*H, W*Cin)   lane-dense activations
        su = su_ref[...]        # (N*H, N*H)     row r <- row r-1 (0 at h==0)
        sd = sd_ref[...]        # (N*H, N*H)     row r <- row r+1 (0 at h==H-1)
        fold = fold_ref[...]    # (W*Cout, W*Cout) per-channel fold/broadcast

        def batchnorm(z, g_l, b_l):
            # training-mode BatchNorm2d, single-pass stats: var = E[z^2]-E[z]^2.
            # `fold` sums over the W lane-groups of each channel and re-expands
            # the per-channel value across all lanes in one MXU pass.
            mean_l = jnp.sum(dot(z, fold), axis=0, keepdims=True) * inv_cnt
            msq_l = jnp.sum(dot(z * z, fold), axis=0, keepdims=True) * inv_cnt
            var_l = msq_l - mean_l * mean_l
            return (z - mean_l) * (lax.rsqrt(var_l + _EPS) * g_l) + b_l

        def silu(z):
            # NOTE: flip approx=True to push the reciprocal onto the EUP slot;
            # kept exact here so the f32 check against the reference stays tight.
            return z * pl.reciprocal(1.0 + jnp.exp(-z), approx=False)

        # ---- conv1 (3 band matmuls); the centre band is widened to also
        #      produce the 1x1-shortcut pre-activation in the same MXU pass ---
        tc = dot(x, w1cs_ref[...])                          # (N*H, 2*W*Cout)
        h1 = (tc[:, :WC]
              + dot(su, dot(x, w1u_ref[...]))               # kh = 0 (row h-1)
              + dot(sd, dot(x, w1d_ref[...]))               # kh = 2 (row h+1)
              + b1_ref[...])
        h1 = silu(batchnorm(h1, g1_ref[...], bt1_ref[...]))

        # ---- shortcut BN (pre-activation came out of the fused matmul) ----
        ident = batchnorm(tc[:, WC:] + bs_ref[...], gs_ref[...], bts_ref[...])

        # ---- conv2 (3 band matmuls) -> BN ----
        h2 = (dot(h1, w2c_ref[...])
              + dot(su, dot(h1, w2u_ref[...]))
              + dot(sd, dot(h1, w2d_ref[...]))
              + b2_ref[...])
        h2 = batchnorm(h2, g2_ref[...], bt2_ref[...])

        # ---- residual add + SiLU; lane-dense unmasked output store ----
        out_ref[...] = silu(h2 + ident)

    return kernel


def _band_matrices(w_hwio, W):
    """3x3 'same' conv -> per-kh band matrices over the lane-dense layout.

    Returns (3, W*Ci, W*Co).  bands[kh] maps the (.., W*Ci) input row at
    spatial row h+(kh-1) to its contribution to the (.., W*Co) output row h;
    the kw taps and W-boundary zeroing are encoded in the band structure.
    """
    kh_, kw_, Ci, Co = w_hwio.shape
    assert (kh_, kw_) == (3, 3)
    # sel[kw][wp, w] = 1 iff wp == w + (kw - 1)
    sel = jnp.stack([jnp.eye(W, k=1), jnp.eye(W), jnp.eye(W, k=-1)])   # (3,W,W)
    b = jnp.einsum("kab,hkio->haibo", sel, w_hwio)           # (3, W, Ci, W, Co)
    return b.reshape(3, W * Ci, W * Co).astype(jnp.float32)


def residual_block_forward(x_nchw, params):
    x = jnp.transpose(x_nchw, (0, 2, 3, 1)).astype(jnp.float32)   # NCHW -> NHWC
    N, H, W, Cin = x.shape
    Cout = params["w1"].shape[-1]
    NH, WC = N * H, W * Cout

    # lane-dense activation layout: rows=(n,h), lanes=(w,c)
    x_ld = x.reshape(NH, W * Cin)

    # conv weights -> band matrices; 1x1 shortcut -> block-diagonal matrix,
    # fused into conv1's centre band (widen N to 2*W*Cout).
    B1 = _band_matrices(params["w1"], W)                     # (3, W*Cin, WC)
    B2 = _band_matrices(params["w2"], W)                     # (3, WC, WC)
    Bs = jnp.einsum("ab,io->aibo", jnp.eye(W), params["ws"]).reshape(W * Cin, WC)
    w1_cs = jnp.concatenate([B1[1], Bs.astype(jnp.float32)], axis=1)  # (W*Cin, 2*WC)

    # block-diagonal row-shift operators (kh offset + H-boundary zeroing)
    su = jnp.kron(jnp.eye(N), jnp.eye(H, k=-1)).astype(jnp.float32)   # row r-1
    sd = jnp.kron(jnp.eye(N), jnp.eye(H, k=1)).astype(jnp.float32)    # row r+1

    # per-channel fold / lane-broadcast matrix for BatchNorm statistics
    fold = jnp.tile(jnp.eye(Cout, dtype=jnp.float32), (W, W))         # (WC, WC)

    lane = lambda v: jnp.tile(v.reshape(1, Cout).astype(jnp.float32), (1, W))

    args = (x_ld, su, sd,
            B1[0], w1_cs, B1[2],
            B2[0], B2[1], B2[2],
            fold,
            lane(params["b1"]), lane(params["g1"]), lane(params["bt1"]),
            lane(params["b2"]), lane(params["g2"]), lane(params["bt2"]),
            lane(params["bs"]), lane(params["gs"]), lane(params["bts"]))

    vmem = pl.BlockSpec(memory_space=pltpu.MemorySpace.VMEM)
    out_ld = pl.pallas_call(
        _make_resblock_kernel(N, H, W, Cin, Cout),
        out_shape=jax.ShapeDtypeStruct((NH, WC), jnp.float32),
        in_specs=[vmem] * len(args),
        out_specs=vmem,
    )(*args)

    out = out_ld.reshape(N, H, W, Cout)
    return jnp.transpose(out, (0, 3, 1, 2))                  # NHWC -> NCHW


def make_params(key, cin, cout):
    """Deterministic synthetic parameters (PyTorch layouts, converted)."""
    ks = jax.random.split(key, 9)

    def t2c(w_pt):
        # ConvTranspose2d weight (Cin, Cout, kH, kW) -> equivalent HWIO conv
        # weight (channel swap + spatial flip); valid for stride=1, padding=1.
        return jnp.transpose(w_pt, (2, 3, 0, 1))[::-1, ::-1]

    w1_pt = 0.2 * jax.random.normal(ks[0], (cin, cout, 3, 3), jnp.float32)
    w2_pt = 0.2 * jax.random.normal(ks[1], (cout, cout, 3, 3), jnp.float32)
    ws_pt = 0.2 * jax.random.normal(ks[2], (cin, cout, 1, 1), jnp.float32)
    return dict(
        w1=t2c(w1_pt), w2=t2c(w2_pt), ws=ws_pt[:, :, 0, 0],
        b1=0.1 * jax.random.normal(ks[3], (cout,), jnp.float32),
        b2=0.1 * jax.random.normal(ks[4], (cout,), jnp.float32),
        bs=0.1 * jax.random.normal(ks[5], (cout,), jnp.float32),
        g1=1.0 + 0.1 * jax.random.normal(ks[6], (cout,), jnp.float32),
        g2=1.0 + 0.1 * jax.random.normal(ks[7], (cout,), jnp.float32),
        gs=jnp.ones((cout,), jnp.float32),                  # BN default weight = 1
        bt1=jnp.zeros((cout,), jnp.float32),                # BN default bias = 0
        bt2=0.05 * jax.random.normal(ks[8], (cout,), jnp.float32),
        bts=jnp.zeros((cout,), jnp.float32),
    )


def reference_forward(x_nchw, p):
    """Pure-JAX reference with identical (PyTorch training-mode) semantics."""
    x = jnp.transpose(x_nchw, (0, 2, 3, 1)).astype(jnp.float32)

    def conv3(z, w):
        return lax.conv_general_dilated(
            z, w, window_strides=(1, 1), padding="SAME",
            dimension_numbers=("NHWC", "HWIO", "NHWC"),
            precision=lax.Precision.HIGHEST)

    def bn(z, g, b):
        m = jnp.mean(z, axis=(0, 1, 2), keepdims=True)
        v = jnp.mean((z - m) ** 2, axis=(0, 1, 2), keepdims=True)
        return (z - m) * lax.rsqrt(v + _EPS) * g + b

    silu = lambda z: z * jax.nn.sigmoid(z)

    ident = bn(jnp.einsum("nhwc,cd->nhwd", x, p["ws"],
                          precision=lax.Precision.HIGHEST) + p["bs"],
               p["gs"], p["bts"])
    h = silu(bn(conv3(x, p["w1"]) + p["b1"], p["g1"], p["bt1"]))
    h = bn(conv3(h, p["w2"]) + p["b2"], p["g2"], p["bt2"])
    out = silu(h + ident)
    return jnp.transpose(out, (0, 3, 1, 2))


if __name__ == "__main__":
    N, Cin, H, W = 2, 4, 16, 16
    Cout = 8

    key = jax.random.PRNGKey(0)
    kx, kp = jax.random.split(key)
    x = jax.random.normal(kx, (N, Cin, H, W), jnp.float32)
    params = make_params(kp, Cin, Cout)

    out = jax.block_until_ready(residual_block_forward(x, params))
    ref = jax.block_until_ready(reference_forward(x, params))

    assert out.shape == (N, Cout, H, W), out.shape
    max_err = float(jnp.max(jnp.abs(out - ref)))
    assert jnp.allclose(out, ref, rtol=1e-3, atol=1e-3), max_err
    print("KERNEL_OK")
</pallas_src>

<mosaic_0001>
module attributes {stable_mosaic.version = 11 : i64} {
  func.func @kernel(%arg0: memref<32x64xf32, #tpu.memory_space<vmem>>, %arg1: memref<32x32xf32, #tpu.memory_space<vmem>>, %arg2: memref<32x32xf32, #tpu.memory_space<vmem>>, %arg3: memref<64x128xf32, #tpu.memory_space<vmem>>, %arg4: memref<64x256xf32, #tpu.memory_space<vmem>>, %arg5: memref<64x128xf32, #tpu.memory_space<vmem>>, %arg6: memref<128x128xf32, #tpu.memory_space<vmem>>, %arg7: memref<128x128xf32, #tpu.memory_space<vmem>>, %arg8: memref<128x128xf32, #tpu.memory_space<vmem>>, %arg9: memref<128x128xf32, #tpu.memory_space<vmem>>, %arg10: memref<1x128xf32, #tpu.memory_space<vmem>>, %arg11: memref<1x128xf32, #tpu.memory_space<vmem>>, %arg12: memref<1x128xf32, #tpu.memory_space<vmem>>, %arg13: memref<1x128xf32, #tpu.memory_space<vmem>>, %arg14: memref<1x128xf32, #tpu.memory_space<vmem>>, %arg15: memref<1x128xf32, #tpu.memory_space<vmem>>, %arg16: memref<1x128xf32, #tpu.memory_space<vmem>>, %arg17: memref<1x128xf32, #tpu.memory_space<vmem>>, %arg18: memref<1x128xf32, #tpu.memory_space<vmem>>, %arg19: memref<32x128xf32, #tpu.memory_space<vmem>>) attributes {dimension_semantics = [], scalar_prefetch = 0 : i64, scratch_operands = 0 : i64, tpu.core_type = #tpu.core_type<tc>} {
    %c0 = arith.constant 0 : index
    %c0_0 = arith.constant 0 : index
    %0 = vector.load %arg0[%c0, %c0_0] : memref<32x64xf32, #tpu.memory_space<vmem>>, vector<32x64xf32>
    %c0_1 = arith.constant 0 : index
    %c0_2 = arith.constant 0 : index
    %1 = vector.load %arg1[%c0_1, %c0_2] : memref<32x32xf32, #tpu.memory_space<vmem>>, vector<32x32xf32>
    %c0_3 = arith.constant 0 : index
    %c0_4 = arith.constant 0 : index
    %2 = vector.load %arg2[%c0_3, %c0_4] : memref<32x32xf32, #tpu.memory_space<vmem>>, vector<32x32xf32>
    %c0_5 = arith.constant 0 : index
    %c0_6 = arith.constant 0 : index
    %3 = vector.load %arg9[%c0_5, %c0_6] : memref<128x128xf32, #tpu.memory_space<vmem>>, vector<128x128xf32>
    %c0_7 = arith.constant 0 : index
    %c0_8 = arith.constant 0 : index
    %4 = vector.load %arg4[%c0_7, %c0_8] : memref<64x256xf32, #tpu.memory_space<vmem>>, vector<64x256xf32>
    %cst = arith.constant dense<0.000000e+00> : vector<32x256xf32>
    %5 = tpu.matmul %0, %4, %cst {dimension_numbers = #tpu.dot_dimension_numbers<[1], [0], [0], [1], [0, 0, 1, 1], [], []>} : vector<32x64xf32>, vector<64x256xf32>, vector<32x256xf32> -> vector<32x256xf32>
    %6 = vector.extract_strided_slice %5 {offsets = [0, 0], sizes = [32, 128], strides = [1, 1]} : vector<32x256xf32> to vector<32x128xf32>
    %c0_9 = arith.constant 0 : index
    %c0_10 = arith.constant 0 : index
    %7 = vector.load %arg3[%c0_9, %c0_10] : memref<64x128xf32, #tpu.memory_space<vmem>>, vector<64x128xf32>
    %cst_11 = arith.constant dense<0.000000e+00> : vector<32x128xf32>
    %8 = tpu.matmul %0, %7, %cst_11 {dimension_numbers = #tpu.dot_dimension_numbers<[1], [0], [0], [1], [0, 0, 1, 1], [], []>} : vector<32x64xf32>, vector<64x128xf32>, vector<32x128xf32> -> vector<32x128xf32>
    %cst_12 = arith.constant dense<0.000000e+00> : vector<32x128xf32>
    %9 = tpu.matmul %1, %8, %cst_12 {dimension_numbers = #tpu.dot_dimension_numbers<[1], [0], [0], [1], [0, 0, 1, 1], [], []>} : vector<32x32xf32>, vector<32x128xf32>, vector<32x128xf32> -> vector<32x128xf32>
    %10 = arith.addf %6, %9 : vector<32x128xf32>
    %c0_13 = arith.constant 0 : index
    %c0_14 = arith.constant 0 : index
    %11 = vector.load %arg5[%c0_13, %c0_14] : memref<64x128xf32, #tpu.memory_space<vmem>>, vector<64x128xf32>
    %cst_15 = arith.constant dense<0.000000e+00> : vector<32x128xf32>
    %12 = tpu.matmul %0, %11, %cst_15 {dimension_numbers = #tpu.dot_dimension_numbers<[1], [0], [0], [1], [0, 0, 1, 1], [], []>} : vector<32x64xf32>, vector<64x128xf32>, vector<32x128xf32> -> vector<32x128xf32>
    %cst_16 = arith.constant dense<0.000000e+00> : vector<32x128xf32>
    %13 = tpu.matmul %2, %12, %cst_16 {dimension_numbers = #tpu.dot_dimension_numbers<[1], [0], [0], [1], [0, 0, 1, 1], [], []>} : vector<32x32xf32>, vector<32x128xf32>, vector<32x128xf32> -> vector<32x128xf32>
    %14 = arith.addf %10, %13 : vector<32x128xf32>
    %c0_17 = arith.constant 0 : index
    %c0_18 = arith.constant 0 : index
    %15 = vector.load %arg10[%c0_17, %c0_18] : memref<1x128xf32, #tpu.memory_space<vmem>>, vector<1x128xf32>
    %16 = vector.broadcast %15 : vector<1x128xf32> to vector<32x128xf32>
    %17 = arith.addf %14, %16 : vector<32x128xf32>
    %c0_19 = arith.constant 0 : index
    %c0_20 = arith.constant 0 : index
    %18 = vector.load %arg11[%c0_19, %c0_20] : memref<1x128xf32, #tpu.memory_space<vmem>>, vector<1x128xf32>
    %c0_21 = arith.constant 0 : index
    %c0_22 = arith.constant 0 : index
    %19 = vector.load %arg12[%c0_21, %c0_22] : memref<1x128xf32, #tpu.memory_space<vmem>>, vector<1x128xf32>
    %cst_23 = arith.constant dense<0.000000e+00> : vector<32x128xf32>
    %20 = tpu.matmul %17, %3, %cst_23 {dimension_numbers = #tpu.dot_dimension_numbers<[1], [0], [0], [1], [0, 0, 1, 1], [], []>} : vector<32x128xf32>, vector<128x128xf32>, vector<32x128xf32> -> vector<32x128xf32>
    %cst_24 = arith.constant dense<0.000000e+00> : vector<128xf32>
    %21 = vector.multi_reduction <add>, %20, %cst_24 [0] : vector<32x128xf32> to vector<128xf32>
    %22 = vector.shape_cast %21 : vector<128xf32> to vector<1x128xf32>
    %cst_25 = arith.constant 0.001953125 : f32
    %23 = vector.broadcast %cst_25 : f32 to vector<1x128xf32>
    %24 = arith.mulf %22, %23 : vector<1x128xf32>
    %25 = arith.mulf %17, %17 : vector<32x128xf32>
    %cst_26 = arith.constant dense<0.000000e+00> : vector<32x128xf32>
    %26 = tpu.matmul %25, %3, %cst_26 {dimension_numbers = #tpu.dot_dimension_numbers<[1], [0], [0], [1], [0, 0, 1, 1], [], []>} : vector<32x128xf32>, vector<128x128xf32>, vector<32x128xf32> -> vector<32x128xf32>
    %cst_27 = arith.constant dense<0.000000e+00> : vector<128xf32>
    %27 = vector.multi_reduction <add>, %26, %cst_27 [0] : vector<32x128xf32> to vector<128xf32>
    %28 = vector.shape_cast %27 : vector<128xf32> to vector<1x128xf32>
    %cst_28 = arith.constant 0.001953125 : f32
    %29 = vector.broadcast %cst_28 : f32 to vector<1x128xf32>
    %30 = arith.mulf %28, %29 : vector<1x128xf32>
    %31 = arith.mulf %24, %24 : vector<1x128xf32>
    %32 = arith.subf %30, %31 : vector<1x128xf32>
    %33 = vector.broadcast %24 : vector<1x128xf32> to vector<32x128xf32>
    %34 = arith.subf %17, %33 : vector<32x128xf32>
    %cst_29 = arith.constant 9.99999974E-6 : f32
    %35 = vector.broadcast %cst_29 : f32 to vector<1x128xf32>
    %36 = arith.addf %32, %35 : vector<1x128xf32>
    %37 = math.rsqrt %36 : vector<1x128xf32>
    %38 = arith.mulf %37, %18 : vector<1x128xf32>
    %39 = vector.broadcast %38 : vector<1x128xf32> to vector<32x128xf32>
    %40 = arith.mulf %34, %39 : vector<32x128xf32>
    %41 = vector.broadcast %19 : vector<1x128xf32> to vector<32x128xf32>
    %42 = arith.addf %40, %41 : vector<32x128xf32>
    %cst_30 = arith.constant 0.000000e+00 : f32
    %43 = vector.broadcast %cst_30 : f32 to vector<32x128xf32>
    %44 = arith.subf %43, %42 : vector<32x128xf32>
    %45 = math.exp %44 : vector<32x128xf32>
    %cst_31 = arith.constant 1.000000e+00 : f32
    %46 = vector.broadcast %cst_31 : f32 to vector<32x128xf32>
    %47 = arith.addf %46, %45 : vector<32x128xf32>
    %48 = tpu.reciprocal %47 : vector<32x128xf32> -> vector<32x128xf32>
    %49 = arith.mulf %42, %48 : vector<32x128xf32>
    %50 = vector.extract_strided_slice %5 {offsets = [0, 128], sizes = [32, 128], strides = [1, 1]} : vector<32x256xf32> to vector<32x128xf32>
    %c0_32 = arith.constant 0 : index
    %c0_33 = arith.constant 0 : index
    %51 = vector.load %arg16[%c0_32, %c0_33] : memref<1x128xf32, #tpu.memory_space<vmem>>, vector<1x128xf32>
    %52 = vector.broadcast %51 : vector<1x128xf32> to vector<32x128xf32>
    %53 = arith.addf %50, %52 : vector<32x128xf32>
    %c0_34 = arith.constant 0 : index
    %c0_35 = arith.constant 0 : index
    %54 = vector.load %arg17[%c0_34, %c0_35] : memref<1x128xf32, #tpu.memory_space<vmem>>, vector<1x128xf32>
    %c0_36 = arith.constant 0 : index
    %c0_37 = arith.constant 0 : index
    %55 = vector.load %arg18[%c0_36, %c0_37] : memref<1x128xf32, #tpu.memory_space<vmem>>, vector<1x128xf32>
    %cst_38 = arith.constant dense<0.000000e+00> : vector<32x128xf32>
    %56 = tpu.matmul %53, %3, %cst_38 {dimension_numbers = #tpu.dot_dimension_numbers<[1], [0], [0], [1], [0, 0, 1, 1], [], []>} : vector<32x128xf32>, vector<128x128xf32>, vector<32x128xf32> -> vector<32x128xf32>
    %cst_39 = arith.constant dense<0.000000e+00> : vector<128xf32>
    %57 = vector.multi_reduction <add>, %56, %cst_39 [0] : vector<32x128xf32> to vector<128xf32>
    %58 = vector.shape_cast %57 : vector<128xf32> to vector<1x128xf32>
    %cst_40 = arith.constant 0.001953125 : f32
    %59 = vector.broadcast %cst_40 : f32 to vector<1x128xf32>
    %60 = arith.mulf %58, %59 : vector<1x128xf32>
    %61 = arith.mulf %53, %53 : vector<32x128xf32>
    %cst_41 = arith.constant dense<0.000000e+00> : vector<32x128xf32>
    %62 = tpu.matmul %61, %3, %cst_41 {dimension_numbers = #tpu.dot_dimension_numbers<[1], [0], [0], [1], [0, 0, 1, 1], [], []>} : vector<32x128xf32>, vector<128x128xf32>, vector<32x128xf32> -> vector<32x128xf32>
    %cst_42 = arith.constant dense<0.000000e+00> : vector<128xf32>
    %63 = vector.multi_reduction <add>, %62, %cst_42 [0] : vector<32x128xf32> to vector<128xf32>
    %64 = vector.shape_cast %63 : vector<128xf32> to vector<1x128xf32>
    %cst_43 = arith.constant 0.001953125 : f32
    %65 = vector.broadcast %cst_43 : f32 to vector<1x128xf32>
    %66 = arith.mulf %64, %65 : vector<1x128xf32>
    %67 = arith.mulf %60, %60 : vector<1x128xf32>
    %68 = arith.subf %66, %67 : vector<1x128xf32>
    %69 = vector.broadcast %60 : vector<1x128xf32> to vector<32x128xf32>
    %70 = arith.subf %53, %69 : vector<32x128xf32>
    %cst_44 = arith.constant 9.99999974E-6 : f32
    %71 = vector.broadcast %cst_44 : f32 to vector<1x128xf32>
    %72 = arith.addf %68, %71 : vector<1x128xf32>
    %73 = math.rsqrt %72 : vector<1x128xf32>
    %74 = arith.mulf %73, %54 : vector<1x128xf32>
    %75 = vector.broadcast %74 : vector<1x128xf32> to vector<32x128xf32>
    %76 = arith.mulf %70, %75 : vector<32x128xf32>
    %77 = vector.broadcast %55 : vector<1x128xf32> to vector<32x128xf32>
    %78 = arith.addf %76, %77 : vector<32x128xf32>
    %c0_45 = arith.constant 0 : index
    %c0_46 = arith.constant 0 : index
    %79 = vector.load %arg7[%c0_45, %c0_46] : memref<128x128xf32, #tpu.memory_space<vmem>>, vector<128x128xf32>
    %cst_47 = arith.constant dense<0.000000e+00> : vector<32x128xf32>
    %80 = tpu.matmul %49, %79, %cst_47 {dimension_numbers = #tpu.dot_dimension_numbers<[1], [0], [0], [1], [0, 0, 1, 1], [], []>} : vector<32x128xf32>, vector<128x128xf32>, vector<32x128xf32> -> vector<32x128xf32>
    %c0_48 = arith.constant 0 : index
    %c0_49 = arith.constant 0 : index
    %81 = vector.load %arg6[%c0_48, %c0_49] : memref<128x128xf32, #tpu.memory_space<vmem>>, vector<128x128xf32>
    %cst_50 = arith.constant dense<0.000000e+00> : vector<32x128xf32>
    %82 = tpu.matmul %49, %81, %cst_50 {dimension_numbers = #tpu.dot_dimension_numbers<[1], [0], [0], [1], [0, 0, 1, 1], [], []>} : vector<32x128xf32>, vector<128x128xf32>, vector<32x128xf32> -> vector<32x128xf32>
    %cst_51 = arith.constant dense<0.000000e+00> : vector<32x128xf32>
    %83 = tpu.matmul %1, %82, %cst_51 {dimension_numbers = #tpu.dot_dimension_numbers<[1], [0], [0], [1], [0, 0, 1, 1], [], []>} : vector<32x32xf32>, vector<32x128xf32>, vector<32x128xf32> -> vector<32x128xf32>
    %84 = arith.addf %80, %83 : vector<32x128xf32>
    %c0_52 = arith.constant 0 : index
    %c0_53 = arith.constant 0 : index
    %85 = vector.load %arg8[%c0_52, %c0_53] : memref<128x128xf32, #tpu.memory_space<vmem>>, vector<128x128xf32>
    %cst_54 = arith.constant dense<0.000000e+00> : vector<32x128xf32>
    %86 = tpu.matmul %49, %85, %cst_54 {dimension_numbers = #tpu.dot_dimension_numbers<[1], [0], [0], [1], [0, 0, 1, 1], [], []>} : vector<32x128xf32>, vector<128x128xf32>, vector<32x128xf32> -> vector<32x128xf32>
    %cst_55 = arith.constant dense<0.000000e+00> : vector<32x128xf32>
    %87 = tpu.matmul %2, %86, %cst_55 {dimension_numbers = #tpu.dot_dimension_numbers<[1], [0], [0], [1], [0, 0, 1, 1], [], []>} : vector<32x32xf32>, vector<32x128xf32>, vector<32x128xf32> -> vector<32x128xf32>
    %88 = arith.addf %84, %87 : vector<32x128xf32>
    %c0_56 = arith.constant 0 : index
    %c0_57 = arith.constant 0 : index
    %89 = vector.load %arg13[%c0_56, %c0_57] : memref<1x128xf32, #tpu.memory_space<vmem>>, vector<1x128xf32>
    %90 = vector.broadcast %89 : vector<1x128xf32> to vector<32x128xf32>
    %91 = arith.addf %88, %90 : vector<32x128xf32>
    %c0_58 = arith.constant 0 : index
    %c0_59 = arith.constant 0 : index
    %92 = vector.load %arg14[%c0_58, %c0_59] : memref<1x128xf32, #tpu.memory_space<vmem>>, vector<1x128xf32>
    %c0_60 = arith.constant 0 : index
    %c0_61 = arith.constant 0 : index
    %93 = vector.load %arg15[%c0_60, %c0_61] : memref<1x128xf32, #tpu.memory_space<vmem>>, vector<1x128xf32>
    %cst_62 = arith.constant dense<0.000000e+00> : vector<32x128xf32>
    %94 = tpu.matmul %91, %3, %cst_62 {dimension_numbers = #tpu.dot_dimension_numbers<[1], [0], [0], [1], [0, 0, 1, 1], [], []>} : vector<32x128xf32>, vector<128x128xf32>, vector<32x128xf32> -> vector<32x128xf32>
    %cst_63 = arith.constant dense<0.000000e+00> : vector<128xf32>
    %95 = vector.multi_reduction <add>, %94, %cst_63 [0] : vector<32x128xf32> to vector<128xf32>
    %96 = vector.shape_cast %95 : vector<128xf32> to vector<1x128xf32>
    %cst_64 = arith.constant 0.001953125 : f32
    %97 = vector.broadcast %cst_64 : f32 to vector<1x128xf32>
    %98 = arith.mulf %96, %97 : vector<1x128xf32>
    %99 = arith.mulf %91, %91 : vector<32x128xf32>
    %cst_65 = arith.constant dense<0.000000e+00> : vector<32x128xf32>
    %100 = tpu.matmul %99, %3, %cst_65 {dimension_numbers = #tpu.dot_dimension_numbers<[1], [0], [0], [1], [0, 0, 1, 1], [], []>} : vector<32x128xf32>, vector<128x128xf32>, vector<32x128xf32> -> vector<32x128xf32>
    %cst_66 = arith.constant dense<0.000000e+00> : vector<128xf32>
    %101 = vector.multi_reduction <add>, %100, %cst_66 [0] : vector<32x128xf32> to vector<128xf32>
    %102 = vector.shape_cast %101 : vector<128xf32> to vector<1x128xf32>
    %cst_67 = arith.constant 0.001953125 : f32
    %103 = vector.broadcast %cst_67 : f32 to vector<1x128xf32>
    %104 = arith.mulf %102, %103 : vector<1x128xf32>
    %105 = arith.mulf %98, %98 : vector<1x128xf32>
    %106 = arith.subf %104, %105 : vector<1x128xf32>
    %107 = vector.broadcast %98 : vector<1x128xf32> to vector<32x128xf32>
    %108 = arith.subf %91, %107 : vector<32x128xf32>
    %cst_68 = arith.constant 9.99999974E-6 : f32
    %109 = vector.broadcast %cst_68 : f32 to vector<1x128xf32>
    %110 = arith.addf %106, %109 : vector<1x128xf32>
    %111 = math.rsqrt %110 : vector<1x128xf32>
    %112 = arith.mulf %111, %92 : vector<1x128xf32>
    %113 = vector.broadcast %112 : vector<1x128xf32> to vector<32x128xf32>
    %114 = arith.mulf %108, %113 : vector<32x128xf32>
    %115 = vector.broadcast %93 : vector<1x128xf32> to vector<32x128xf32>
    %116 = arith.addf %114, %115 : vector<32x128xf32>
    %117 = arith.addf %116, %78 : vector<32x128xf32>
    %cst_69 = arith.constant 0.000000e+00 : f32
    %118 = vector.broadcast %cst_69 : f32 to vector<32x128xf32>
    %119 = arith.subf %118, %117 : vector<32x128xf32>
    %120 = math.exp %119 : vector<32x128xf32>
    %cst_70 = arith.constant 1.000000e+00 : f32
    %121 = vector.broadcast %cst_70 : f32 to vector<32x128xf32>
    %122 = arith.addf %121, %120 : vector<32x128xf32>
    %123 = tpu.reciprocal %122 : vector<32x128xf32> -> vector<32x128xf32>
    %124 = arith.mulf %117, %123 : vector<32x128xf32>
    %c0_71 = arith.constant 0 : index
    %c0_72 = arith.constant 0 : index
    %125 = vector.load %arg19[%c0_71, %c0_72] : memref<32x128xf32, #tpu.memory_space<vmem>>, vector<32x128xf32>
    tpu.vector_store %arg19[%c0_71, %c0_72], %124 {strides = array<i32>} : memref<32x128xf32, #tpu.memory_space<vmem>>, vector<32x128xf32>,
    return
  }
}

</mosaic_0001>

<llo_original>
// kernel: tpu_custom_call.1
$region0: #{tpu_custom_call.1}
  #allocation0 [shape = 'u32[]', space=smem, size = 0x4, offset = 0x4, fixed_abs, tag = 'smem constant byte address 0x4 - core index']
  #allocation1 [shape = 'u32[144,128]{1,0:T(1,128)}', space=vmem, size = 0x12000, scoped, tag = 'internal scratch']
  %s0 = inlined_call_operand.hbm [shape: f32[32,64], index: 0, kind: input, shape index: {}]
  %s1 = inlined_call_operand.hbm [shape: f32[32,32], index: 1, kind: input, shape index: {}]
  %s2 = inlined_call_operand.hbm [shape: f32[32,32], index: 2, kind: input, shape index: {}]
  %s3 = inlined_call_operand.hbm [shape: f32[64,128], index: 3, kind: input, shape index: {}]
  %s4 = inlined_call_operand.hbm [shape: f32[64,256], index: 4, kind: input, shape index: {}]
  %s5 = inlined_call_operand.hbm [shape: f32[64,128], index: 5, kind: input, shape index: {}]
  %s6 = inlined_call_operand.hbm [shape: f32[128,128], index: 6, kind: input, shape index: {}]
  %s7 = inlined_call_operand.hbm [shape: f32[128,128], index: 7, kind: input, shape index: {}]
  %s8 = inlined_call_operand.hbm [shape: f32[128,128], index: 8, kind: input, shape index: {}]
  %s9 = inlined_call_operand.hbm [shape: f32[128,128], index: 9, kind: input, shape index: {}]
  %s10 = inlined_call_operand.vmem [shape: f32[1,128], index: 10, kind: input, shape index: {}]
  %s11 = inlined_call_operand.vmem [shape: f32[1,128], index: 11, kind: input, shape index: {}]
  %s12 = inlined_call_operand.vmem [shape: f32[1,128], index: 12, kind: input, shape index: {}]
  %s13 = inlined_call_operand.vmem [shape: f32[1,128], index: 13, kind: input, shape index: {}]
  %s14 = inlined_call_operand.vmem [shape: f32[1,128], index: 14, kind: input, shape index: {}]
  %s15 = inlined_call_operand.vmem [shape: f32[1,128], index: 15, kind: input, shape index: {}]
  %s16 = inlined_call_operand.vmem [shape: f32[1,128], index: 16, kind: input, shape index: {}]
  %s17 = inlined_call_operand.vmem [shape: f32[1,128], index: 17, kind: input, shape index: {}]
  %s18 = inlined_call_operand.vmem [shape: f32[1,128], index: 18, kind: input, shape index: {}]
  %s19 = inlined_call_operand.hbm [shape: f32[32,128], index: 19, kind: output, shape index: {}]
  %s20 = sld [smem:[#allocation0]]
  $region126: #{tpu_custom_call.1} parent=0
    _
  %s22 = ssub.s32 1, %s20
  %s23 = scalar_select 0, %s22, %s20
  $region1: #{tpu_custom_call.1} parent=0
    #allocation2 [shape = 'u8[16384]{0}', space=vmem, size = 0x4000, scoped, tag = 'input window, operand 0, single buffered']
    #allocation3 [shape = 's32[1]{0}', space=sflag, size = 0x4, scoped, tag = 'scoped memory for tpu_custom_call.1']
    #allocation4 [shape = 's32[1]{0}', space=sflag, size = 0x4, scoped, tag = 'scoped memory for tpu_custom_call.1']
    #allocation5 [shape = 'u8[16384]{0}', space=vmem, size = 0x4000, scoped, tag = 'input window, operand 1, single buffered']
    #allocation6 [shape = 's32[1]{0}', space=sflag, size = 0x4, scoped, tag = 'scoped memory for tpu_custom_call.1']
    #allocation7 [shape = 'u8[16384]{0}', space=vmem, size = 0x4000, scoped, tag = 'input window, operand 2, single buffered']
    #allocation8 [shape = 'u8[32768]{0}', space=vmem, size = 0x8000, scoped, tag = 'input window, operand 3, single buffered']
    #allocation9 [shape = 's32[1]{0}', space=sflag, size = 0x4, scoped, tag = 'scoped memory for tpu_custom_call.1']
    #allocation10 [shape = 'u8[65536]{0}', space=vmem, size = 0x10000, scoped, tag = 'input window, operand 4, single buffered']
    #allocation11 [shape = 'u8[32768]{0}', space=vmem, size = 0x8000, scoped, tag = 'input window, operand 5, single buffered']
    #allocation12 [shape = 's32[1]{0}', space=sflag, size = 0x4, scoped, tag = 'scoped memory for tpu_custom_call.1']
    #allocation13 [shape = 'u8[65536]{0}', space=vmem, size = 0x10000, scoped, tag = 'input window, operand 6, single buffered']
    #allocation14 [shape = 'u8[65536]{0}', space=vmem, size = 0x10000, scoped, tag = 'input window, operand 7, single buffered']
    #allocation15 [shape = 's32[1]{0}', space=sflag, size = 0x4, scoped, tag = 'scoped memory for tpu_custom_call.1']
    #allocation16 [shape = 'u8[65536]{0}', space=vmem, size = 0x10000, scoped, tag = 'input window, operand 8, single buffered']
    #allocation17 [shape = 'u8[65536]{0}', space=vmem, size = 0x10000, scoped, tag = 'input window, operand 9, single buffered']
    #allocation18 [shape = 's32[1]{0}', space=sflag, size = 0x4, scoped, tag = 'scoped memory for tpu_custom_call.1']
    #allocation19 [shape = 'u8[16384]{0}', space=vmem, size = 0x4000, scoped, tag = 'output window, operand 0, single buffered']
    %24 = vsyncpa [#allocation3], 0
    %25 = vsyncpa [#allocation6], 0
    %26 = vsyncpa [#allocation9], 0
    %27 = vsyncpa [#allocation12], 0
    %28 = vsyncpa [#allocation15], 0
    %29 = vsyncpa [#allocation18], 0
    %30 = vsyncpa [#allocation4], 0
    // Predicated region
    $region2: #{tpu_custom_call.1} parent=1 // pred_check
      _
    $region3: #{tpu_custom_call.1} parent=1 // pred_check_branch
      %32 = sbr.rel (0) target = $region5
    $region4: #{tpu_custom_call.1} parent=1 // pred_region
      %s34 = ssub.s32 512, 512
      %35 = vsyncadd [#allocation3], %s34
      %s36 = sshll.u32 [#allocation2], 4
      %s37 = int_to_ptr.vmem [resolvable:$true] %s36
      %42 = dma.hbm_to_vmem [thread:$0]  %s0, 512, %s37, [#allocation3], 128, 128, 8
    $region5: #{tpu_custom_call.1} parent=1 // pred_fallthru
      _
    // Predicated region
    $region6: #{tpu_custom_call.1} parent=1 // pred_check
      _
    $region7: #{tpu_custom_call.1} parent=1 // pred_check_branch
      %44 = sbr.rel (0) target = $region9
    $region8: #{tpu_custom_call.1} parent=1 // pred_region
      %s46 = ssub.s32 512, 512
      %47 = vsyncadd [#allocation6], %s46
      %s48 = sshll.u32 [#allocation5], 4
      %s49 = int_to_ptr.vmem [resolvable:$true] %s48
      %54 = dma.hbm_to_vmem [thread:$0]  %s1, 512, %s49, [#allocation6], 128, 128, 8
    $region9: #{tpu_custom_call.1} parent=1 // pred_fallthru
      _
    // Predicated region
    $region10: #{tpu_custom_call.1} parent=1 // pred_check
      _
    $region11: #{tpu_custom_call.1} parent=1 // pred_check_branch
      %56 = sbr.rel (0) target = $region13
    $region12: #{tpu_custom_call.1} parent=1 // pred_region
      %s58 = ssub.s32 512, 512
      %59 = vsyncadd [#allocation6], %s58
      %s60 = sshll.u32 [#allocation7], 4
      %s61 = int_to_ptr.vmem [resolvable:$true] %s60
      %66 = dma.hbm_to_vmem [thread:$0]  %s2, 512, %s61, [#allocation6], 128, 128, 8
    $region13: #{tpu_custom_call.1} parent=1 // pred_fallthru
      _
    // Predicated region
    $region14: #{tpu_custom_call.1} parent=1 // pred_check
      _
    $region15: #{tpu_custom_call.1} parent=1 // pred_check_branch
      %68 = sbr.rel (0) target = $region17
    $region16: #{tpu_custom_call.1} parent=1 // pred_region
      %s70 = ssub.s32 1024, 1024
      %71 = vsyncadd [#allocation9], %s70
      %s72 = sshll.u32 [#allocation8], 4
      %s73 = int_to_ptr.vmem [resolvable:$true] %s72
      %78 = dma.hbm_to_vmem [thread:$0]  %s3, 1024, %s73, [#allocation9], 128, 128, 8
    $region17: #{tpu_custom_call.1} parent=1 // pred_fallthru
      _
    // Predicated region
    $region18: #{tpu_custom_call.1} parent=1 // pred_check
      _
    $region19: #{tpu_custom_call.1} parent=1 // pred_check_branch
      %80 = sbr.rel (0) target = $region21
    $region20: #{tpu_custom_call.1} parent=1 // pred_region
      %s82 = ssub.s32 2048, 2048
      %83 = vsyncadd [#allocation9], %s82
      %s84 = sshll.u32 [#allocation10], 4
      %s85 = int_to_ptr.vmem [resolvable:$true] %s84
      %90 = dma.hbm_to_vmem [thread:$0]  %s4, 2048, %s85, [#allocation9], 256, 256, 16
    $region21: #{tpu_custom_call.1} parent=1 // pred_fallthru
      _
    // Predicated region
    $region22: #{tpu_custom_call.1} parent=1 // pred_check
      _
    $region23: #{tpu_custom_call.1} parent=1 // pred_check_branch
      %92 = sbr.rel (0) target = $region25
    $region24: #{tpu_custom_call.1} parent=1 // pred_region
      %s94 = ssub.s32 1024, 1024
      %95 = vsyncadd [#allocation12], %s94
      %s96 = sshll.u32 [#allocation11], 4
      %s97 = int_to_ptr.vmem [resolvable:$true] %s96
      %102 = dma.hbm_to_vmem [thread:$0]  %s5, 1024, %s97, [#allocation12], 128, 128, 8
    $region25: #{tpu_custom_call.1} parent=1 // pred_fallthru
      _
    // Predicated region
    $region26: #{tpu_custom_call.1} parent=1 // pred_check
      _
    $region27: #{tpu_custom_call.1} parent=1 // pred_check_branch
      %104 = sbr.rel (0) target = $region29
    $region28: #{tpu_custom_call.1} parent=1 // pred_region
      %s106 = ssub.s32 2048, 2048
      %107 = vsyncadd [#allocation12], %s106
      %s108 = sshll.u32 [#allocation13], 4
      %s109 = int_to_ptr.vmem [resolvable:$true] %s108
      %114 = dma.hbm_to_vmem [thread:$0]  %s6, 2048, %s109, [#allocation12], 128, 128, 8
    $region29: #{tpu_custom_call.1} parent=1 // pred_fallthru
      _
    // Predicated region
    $region30: #{tpu_custom_call.1} parent=1 // pred_check
      _
    $region31: #{tpu_custom_call.1} parent=1 // pred_check_branch
      %116 = sbr.rel (0) target = $region33
    $region32: #{tpu_custom_call.1} parent=1 // pred_region
      %s118 = ssub.s32 2048, 2048
      %119 = vsyncadd [#allocation15], %s118
      %s120 = sshll.u32 [#allocation14], 4
      %s121 = int_to_ptr.vmem [resolvable:$true] %s120
      %126 = dma.hbm_to_vmem [thread:$0]  %s7, 2048, %s121, [#allocation15], 128, 128, 8
    $region33: #{tpu_custom_call.1} parent=1 // pred_fallthru
      _
    // Predicated region
    $region34: #{tpu_custom_call.1} parent=1 // pred_check
      _
    $region35: #{tpu_custom_call.1} parent=1 // pred_check_branch
      %128 = sbr.rel (0) target = $region37
    $region36: #{tpu_custom_call.1} parent=1 // pred_region
      %s130 = ssub.s32 2048, 2048
      %131 = vsyncadd [#allocation15], %s130
      %s132 = sshll.u32 [#allocation16], 4
      %s133 = int_to_ptr.vmem [resolvable:$true] %s132
      %138 = dma.hbm_to_vmem [thread:$0]  %s8, 2048, %s133, [#allocation15], 128, 128, 8
    $region37: #{tpu_custom_call.1} parent=1 // pred_fallthru
      _
    // Predicated region
    $region38: #{tpu_custom_call.1} parent=1 // pred_check
      _
    $region39: #{tpu_custom_call.1} parent=1 // pred_check_branch
      %140 = sbr.rel (0) target = $region41
    $region40: #{tpu_custom_call.1} parent=1 // pred_region
      %s142 = ssub.s32 2048, 2048
      %143 = vsyncadd [#allocation18], %s142
      %s144 = sshll.u32 [#allocation17], 4
      %s145 = int_to_ptr.vmem [resolvable:$true] %s144
      %150 = dma.hbm_to_vmem [thread:$0]  %s9, 2048, %s145, [#allocation18], 128, 128, 8
    $region41: #{tpu_custom_call.1} parent=1 // pred_fallthru
      _
    // Predicated region
    $region42: #{tpu_custom_call.1} parent=1 // pred_check
      _
    $region43: #{tpu_custom_call.1} parent=1 // pred_check_branch
      %152 = sbr.rel (0) target = $region45
    $region44: #{tpu_custom_call.1} parent=1 // pred_region
      _
    $region45: #{tpu_custom_call.1} parent=1 // pred_fallthru
      _
    // Predicated region
    $region46: #{tpu_custom_call.1} parent=1 // pred_check
      _
    $region47: #{tpu_custom_call.1} parent=1 // pred_check_branch
      %154 = sbr.rel (0) target = $region49
    $region48: #{tpu_custom_call.1} parent=1 // pred_region
      _
    $region49: #{tpu_custom_call.1} parent=1 // pred_fallthru
      _
    // Predicated region
    $region50: #{tpu_custom_call.1} parent=1 // pred_check
      _
    $region51: #{tpu_custom_call.1} parent=1 // pred_check_branch
      %156 = sbr.rel (0) target = $region53
    $region52: #{tpu_custom_call.1} parent=1 // pred_region
      _
    $region53: #{tpu_custom_call.1} parent=1 // pred_fallthru
      _
    // Predicated region
    $region54: #{tpu_custom_call.1} parent=1 // pred_check
      _
    $region55: #{tpu_custom_call.1} parent=1 // pred_check_branch
      %158 = sbr.rel (0) target = $region57
    $region56: #{tpu_custom_call.1} parent=1 // pred_region
      _
    $region57: #{tpu_custom_call.1} parent=1 // pred_fallthru
      _
    // Predicated region
    $region58: #{tpu_custom_call.1} parent=1 // pred_check
      _
    $region59: #{tpu_custom_call.1} parent=1 // pred_check_branch
      %160 = sbr.rel (0) target = $region61
    $region60: #{tpu_custom_call.1} parent=1 // pred_region
      _
    $region61: #{tpu_custom_call.1} parent=1 // pred_fallthru
      _
    // Predicated region
    $region62: #{tpu_custom_call.1} parent=1 // pred_check
      _
    $region63: #{tpu_custom_call.1} parent=1 // pred_check_branch
      %162 = sbr.rel (0) target = $region65
    $region64: #{tpu_custom_call.1} parent=1 // pred_region
      _
    $region65: #{tpu_custom_call.1} parent=1 // pred_fallthru
      _
    // Predicated region
    $region66: #{tpu_custom_call.1} parent=1 // pred_check
      _
    $region67: #{tpu_custom_call.1} parent=1 // pred_check_branch
      %164 = sbr.rel (0) target = $region69
    $region68: #{tpu_custom_call.1} parent=1 // pred_region
      _
    $region69: #{tpu_custom_call.1} parent=1 // pred_fallthru
      _
    // Predicated region
    $region70: #{tpu_custom_call.1} parent=1 // pred_check
      _
    $region71: #{tpu_custom_call.1} parent=1 // pred_check_branch
      %166 = sbr.rel (0) target = $region73
    $region72: #{tpu_custom_call.1} parent=1 // pred_region
      _
    $region73: #{tpu_custom_call.1} parent=1 // pred_fallthru
      _
    // Predicated region
    $region74: #{tpu_custom_call.1} parent=1 // pred_check
      _
    $region75: #{tpu_custom_call.1} parent=1 // pred_check_branch
      %168 = sbr.rel (0) target = $region77
    $region76: #{tpu_custom_call.1} parent=1 // pred_region
      _
    $region77: #{tpu_custom_call.1} parent=1 // pred_fallthru
      _
    // Predicated region
    $region78: #{tpu_custom_call.1} parent=1 // pred_check
      _
    $region79: #{tpu_custom_call.1} parent=1 // pred_check_branch
      %170 = sbr.rel (0) target = $region81
    $region80: #{tpu_custom_call.1} parent=1 // pred_region
      %171 = dma.done [#allocation3], 512
    $region81: #{tpu_custom_call.1} parent=1 // pred_fallthru
      _
    // Predicated region
    $region82: #{tpu_custom_call.1} parent=1 // pred_check
      _
    $region83: #{tpu_custom_call.1} parent=1 // pred_check_branch
      %173 = sbr.rel (0) target = $region85
    $region84: #{tpu_custom_call.1} parent=1 // pred_region
      %174 = dma.done [#allocation6], 512
    $region85: #{tpu_custom_call.1} parent=1 // pred_fallthru
      _
    // Predicated region
    $region86: #{tpu_custom_call.1} parent=1 // pred_check
      _
    $region87: #{tpu_custom_call.1} parent=1 // pred_check_branch
      %176 = sbr.rel (0) target = $region89
    $region88: #{tpu_custom_call.1} parent=1 // pred_region
      %177 = dma.done [#allocation6], 512
    $region89: #{tpu_custom_call.1} parent=1 // pred_fallthru
      _
    // Predicated region
    $region90: #{tpu_custom_call.1} parent=1 // pred_check
      _
    $region91: #{tpu_custom_call.1} parent=1 // pred_check_branch
      %179 = sbr.rel (0) target = $region93
    $region92: #{tpu_custom_call.1} parent=1 // pred_region
      %180 = dma.done [#allocation9], 1024
    $region93: #{tpu_custom_call.1} parent=1 // pred_fallthru
      _
    // Predicated region
    $region94: #{tpu_custom_call.1} parent=1 // pred_check
      _
    $region95: #{tpu_custom_call.1} parent=1 // pred_check_branch
      %182 = sbr.rel (0) target = $region97
    $region96: #{tpu_custom_call.1} parent=1 // pred_region
      %183 = dma.done [#allocation9], 2048
    $region97: #{tpu_custom_call.1} parent=1 // pred_fallthru
      _
    // Predicated region
    $region98: #{tpu_custom_call.1} parent=1 // pred_check
      _
    $region99: #{tpu_custom_call.1} parent=1 // pred_check_branch
      %185 = sbr.rel (0) target = $region101
    $region100: #{tpu_custom_call.1} parent=1 // pred_region
      %186 = dma.done [#allocation12], 1024
    $region101: #{tpu_custom_call.1} parent=1 // pred_fallthru
      _
    // Predicated region
    $region102: #{tpu_custom_call.1} parent=1 // pred_check
      _
    $region103: #{tpu_custom_call.1} parent=1 // pred_check_branch
      %188 = sbr.rel (0) target = $region105
    $region104: #{tpu_custom_call.1} parent=1 // pred_region
      %189 = dma.done [#allocation12], 2048
    $region105: #{tpu_custom_call.1} parent=1 // pred_fallthru
      _
    // Predicated region
    $region106: #{tpu_custom_call.1} parent=1 // pred_check
      _
    $region107: #{tpu_custom_call.1} parent=1 // pred_check_branch
      %191 = sbr.rel (0) target = $region109
    $region108: #{tpu_custom_call.1} parent=1 // pred_region
      %192 = dma.done [#allocation15], 2048
    $region109: #{tpu_custom_call.1} parent=1 // pred_fallthru
      _
    // Predicated region
    $region110: #{tpu_custom_call.1} parent=1 // pred_check
      _
    $region111: #{tpu_custom_call.1} parent=1 // pred_check_branch
      %194 = sbr.rel (0) target = $region113
    $region112: #{tpu_custom_call.1} parent=1 // pred_region
      %195 = dma.done [#allocation15], 2048
    $region113: #{tpu_custom_call.1} parent=1 // pred_fallthru
      _
    // Predicated region
    $region114: #{tpu_custom_call.1} parent=1 // pred_check
      _
    $region115: #{tpu_custom_call.1} parent=1 // pred_check_branch
      %197 = sbr.rel (0) target = $region117
    $region116: #{tpu_custom_call.1} parent=1 // pred_region
      %198 = dma.done [#allocation18], 2048
    $region117: #{tpu_custom_call.1} parent=1 // pred_fallthru
      _
    %v199 = vld [vmem:[#allocation2] sm:$0xff]
    %v200 = vld [vmem:[#allocation2 + $0x8] sm:$0xff]
    %v201 = vld [vmem:[#allocation2 + $0x10] sm:$0xff]
    %v202 = vld [vmem:[#allocation2 + $0x18] sm:$0xff]
    %v203 = vld [vmem:[#allocation5] sm:$0xff]
    %v204 = vld [vmem:[#allocation5 + $0x8] sm:$0xff]
    %v205 = vld [vmem:[#allocation5 + $0x10] sm:$0xff]
    %v206 = vld [vmem:[#allocation5 + $0x18] sm:$0xff]
    %v207 = vld [vmem:[#allocation7] sm:$0xff]
    %v208 = vld [vmem:[#allocation7 + $0x8] sm:$0xff]
    %v209 = vld [vmem:[#allocation7 + $0x10] sm:$0xff]
    %v210 = vld [vmem:[#allocation7 + $0x18] sm:$0xff]
    %v211 = vld [vmem:[#allocation17] sm:$0xff]
    %v212 = vld [vmem:[#allocation17 + $0x8] sm:$0xff]
    %v213 = vld [vmem:[#allocation17 + $0x10] sm:$0xff]
    %v214 = vld [vmem:[#allocation17 + $0x18] sm:$0xff]
    %v215 = vld [vmem:[#allocation17 + $0x20] sm:$0xff]
    %v216 = vld [vmem:[#allocation17 + $0x28] sm:$0xff]
    %v217 = vld [vmem:[#allocation17 + $0x30] sm:$0xff]
    %v218 = vld [vmem:[#allocation17 + $0x38] sm:$0xff]
    %v219 = vld [vmem:[#allocation17 + $0x40] sm:$0xff]
    %v220 = vld [vmem:[#allocation17 + $0x48] sm:$0xff]
    %v221 = vld [vmem:[#allocation17 + $0x50] sm:$0xff]
    %v222 = vld [vmem:[#allocation17 + $0x58] sm:$0xff]
    %v223 = vld [vmem:[#allocation17 + $0x60] sm:$0xff]
    %v224 = vld [vmem:[#allocation17 + $0x68] sm:$0xff]
    %v225 = vld [vmem:[#allocation17 + $0x70] sm:$0xff]
    %v226 = vld [vmem:[#allocation17 + $0x78] sm:$0xff]
    %v227 = vld [vmem:[#allocation10] sm:$0xff]
    %v228 = vld [vmem:[#allocation10 + $0x8] sm:$0xff]
    %v229 = vld [vmem:[#allocation10 + $0x10] sm:$0xff]
    %v230 = vld [vmem:[#allocation10 + $0x18] sm:$0xff]
    %v231 = vld [vmem:[#allocation10 + $0x20] sm:$0xff]
    %v232 = vld [vmem:[#allocation10 + $0x28] sm:$0xff]
    %v233 = vld [vmem:[#allocation10 + $0x30] sm:$0xff]
    %v234 = vld [vmem:[#allocation10 + $0x38] sm:$0xff]
    %v235 = vld [vmem:[#allocation10 + $0x40] sm:$0xff]
    %v236 = vld [vmem:[#allocation10 + $0x48] sm:$0xff]
    %v237 = vld [vmem:[#allocation10 + $0x50] sm:$0xff]
    %v238 = vld [vmem:[#allocation10 + $0x58] sm:$0xff]
    %v239 = vld [vmem:[#allocation10 + $0x60] sm:$0xff]
    %v240 = vld [vmem:[#allocation10 + $0x68] sm:$0xff]
    %v241 = vld [vmem:[#allocation10 + $0x70] sm:$0xff]
    %v242 = vld [vmem:[#allocation10 + $0x78] sm:$0xff]
    %vm243 = vcmask 523264
    %v245 = vsel %vm243, %v199, 0
    %v248 = vsel %vm243, %v200, 0
    %v251 = vsel %vm243, %v201, 0
    %v254 = vsel %vm243, %v202, 0
    %256 = vmatprep.subr.mxu0 %v228
    %257 = vmatpush1.msra.mxu0 %v227
    %258 = vmatprep.subr.mxu0 %v230
    %259 = vmatpush1.msra.mxu0 %v229
    %260 = vmatprep.subr.mxu0 %v232
    %261 = vmatpush1.msra.mxu0 %v231
    %262 = vmatprep.subr.mxu0 %v234
    %263 = vmatpush1.msra.mxu0 %v233
    %264 = vmatprep.subr.mxu0 %v236
    %265 = vmatpush1.msra.mxu0 %v235
    %266 = vmatprep.subr.mxu0 %v238
    %267 = vmatpush1.msra.mxu0 %v237
    %268 = vmatprep.subr.mxu0 %v240
    %269 = vmatpush1.msra.mxu0 %v239
    %270 = vmatprep.subr.mxu0 %v242
    %271 = vmatpush1.msra.mxu0 %v241
    %272 = vmatprep.subr.mxu0 0.0
    %273 = vmatpush1.msra.mxu0 0.0
    %274 = vmatprep.subr.mxu0 0.0
    %275 = vmatpush1.msra.mxu0 0.0
    %276 = vmatprep.subr.mxu0 0.0
    %277 = vmatpush1.msra.mxu0 0.0
    %278 = vmatprep.subr.mxu0 0.0
    %279 = vmatpush1.msra.mxu0 0.0
    %280 = vmatprep.subr.mxu0 0.0
    %281 = vmatpush1.msra.mxu0 0.0
    %282 = vmatprep.subr.mxu0 0.0
    %283 = vmatpush1.msra.mxu0 0.0
    %284 = vmatprep.subr.mxu0 0.0
    %285 = vmatpush1.msra.mxu0 0.0
    %286 = vmatprep.subr.mxu0 0.0
    %287 = vmatpush1.msra.mxu0 0.0
    %288 = vmatprep.subr.mxu0 0.0
    %289 = vmatpush1.msra.mxu0 0.0
    %290 = vmatprep.subr.mxu0 0.0
    %291 = vmatpush1.msra.mxu0 0.0
    %292 = vmatprep.subr.mxu0 0.0
    %293 = vmatpush1.msra.mxu0 0.0
    %294 = vmatprep.subr.mxu0 0.0
    %295 = vmatpush1.msra.mxu0 0.0
    %296 = vmatprep.subr.mxu0 0.0
    %297 = vmatpush1.msra.mxu0 0.0
    %298 = vmatprep.subr.mxu0 0.0
    %299 = vmatpush1.msra.mxu0 0.0
    %300 = vmatprep.subr.mxu0 0.0
    %301 = vmatpush1.msra.mxu0 0.0
    %302 = vmatprep.subr.mxu0 0.0
    %303 = vmatpush1.msra.mxu0 0.0
    %304 = vmatprep.subr.mxu0 0.0
    %305 = vmatpush1.msra.mxu0 0.0
    %306 = vmatprep.subr.mxu0 0.0
    %307 = vmatpush1.msra.mxu0 0.0
    %308 = vmatprep.subr.mxu0 0.0
    %309 = vmatpush1.msra.mxu0 0.0
    %310 = vmatprep.subr.mxu0 0.0
    %311 = vmatpush1.msra.mxu0 0.0
    %312 = vmatprep.subr.mxu0 0.0
    %313 = vmatpush1.msra.mxu0 0.0
    %314 = vmatprep.subr.mxu0 0.0
    %315 = vmatpush1.msra.mxu0 0.0
    %316 = vmatprep.subr.mxu0 0.0
    %317 = vmatpush1.msra.mxu0 0.0
    %318 = vmatprep.subr.mxu0 0.0
    %319 = vmatpush1.msra.mxu0 0.0
    %320 = vmatprep.mubr.f32.mxu0 0.0
    %321 = vmatmul.mubr.f32.gmra.mrb[0].mxu0 %v245
    %v322 = vpop.f32.mrb[0].mxu0
    %v323 = vadd.f32 0.0, %v322
    %v324 = vpop.f32.mrb[0].mxu0
    %v325 = vadd.f32 0.0, %v324
    %326 = vmatprep.mubr.f32.mxu0 0.0
    %327 = vmatmul.mubr.f32.gmra.mrb[0].mxu0 %v248
    %v328 = vpop.f32.mrb[0].mxu0
    %v329 = vadd.f32 0.0, %v328
    %v330 = vpop.f32.mrb[0].mxu0
    %v331 = vadd.f32 0.0, %v330
    %332 = vmatprep.mubr.f32.mxu0 0.0
    %333 = vmatmul.mubr.f32.gmra.mrb[0].mxu0 %v251
    %v334 = vpop.f32.mrb[0].mxu0
    %v335 = vadd.f32 0.0, %v334
    %v336 = vpop.f32.mrb[0].mxu0
    %v337 = vadd.f32 0.0, %v336
    %338 = vmatprep.mubr.f32.mxu0 0.0
    %339 = vmatmul.mubr.f32.gmra.mrb[0].mxu0 %v254
    %v340 = vpop.f32.mrb[0].mxu0
    %v341 = vadd.f32 0.0, %v340
    %v342 = vpop.f32.mrb[0].mxu0
    %v343 = vadd.f32 0.0, %v342
    %344 = vdwg.mxu0
    %v345 = vld [vmem:[#allocation8] sm:$0xff]
    %v346 = vld [vmem:[#allocation8 + $0x8] sm:$0xff]
    %v347 = vld [vmem:[#allocation8 + $0x10] sm:$0xff]
    %v348 = vld [vmem:[#allocation8 + $0x18] sm:$0xff]
    %v349 = vld [vmem:[#allocation8 + $0x20] sm:$0xff]
    %v350 = vld [vmem:[#allocation8 + $0x28] sm:$0xff]
    %v351 = vld [vmem:[#allocation8 + $0x30] sm:$0xff]
    %v352 = vld [vmem:[#allocation8 + $0x38] sm:$0xff]
    %353 = vmatprep.subr.mxu0 0.0
    %354 = vmatpush1.msra.mxu0 %v345
    %355 = vmatprep.subr.mxu0 0.0
    %356 = vmatpush1.msra.mxu0 %v346
    %357 = vmatprep.subr.mxu0 0.0
    %358 = vmatpush1.msra.mxu0 %v347
    %359 = vmatprep.subr.mxu0 0.0
    %360 = vmatpush1.msra.mxu0 %v348
    %361 = vmatprep.subr.mxu0 0.0
    %362 = vmatpush1.msra.mxu0 %v349
    %363 = vmatprep.subr.mxu0 0.0
    %364 = vmatpush1.msra.mxu0 %v350
    %365 = vmatprep.subr.mxu0 0.0
    %366 = vmatpush1.msra.mxu0 %v351
    %367 = vmatprep.subr.mxu0 0.0
    %368 = vmatpush1.msra.mxu0 %v352
    %369 = vmatprep.subr.mxu0 0.0
    %370 = vmatpush1.msra.mxu0 0.0
    %371 = vmatprep.subr.mxu0 0.0
    %372 = vmatpush1.msra.mxu0 0.0
    %373 = vmatprep.subr.mxu0 0.0
    %374 = vmatpush1.msra.mxu0 0.0
    %375 = vmatprep.subr.mxu0 0.0
    %376 = vmatpush1.msra.mxu0 0.0
    %377 = vmatprep.subr.mxu0 0.0
    %378 = vmatpush1.msra.mxu0 0.0
    %379 = vmatprep.subr.mxu0 0.0
    %380 = vmatpush1.msra.mxu0 0.0
    %381 = vmatprep.subr.mxu0 0.0
    %382 = vmatpush1.msra.mxu0 0.0
    %383 = vmatprep.subr.mxu0 0.0
    %384 = vmatpush1.msra.mxu0 0.0
    %385 = vmatprep.subr.mxu0 0.0
    %386 = vmatpush1.msra.mxu0 0.0
    %387 = vmatprep.subr.mxu0 0.0
    %388 = vmatpush1.msra.mxu0 0.0
    %389 = vmatprep.subr.mxu0 0.0
    %390 = vmatpush1.msra.mxu0 0.0
    %391 = vmatprep.subr.mxu0 0.0
    %392 = vmatpush1.msra.mxu0 0.0
    %393 = vmatprep.subr.mxu0 0.0
    %394 = vmatpush1.msra.mxu0 0.0
    %395 = vmatprep.subr.mxu0 0.0
    %396 = vmatpush1.msra.mxu0 0.0
    %397 = vmatprep.subr.mxu0 0.0
    %398 = vmatpush1.msra.mxu0 0.0
    %399 = vmatprep.subr.mxu0 0.0
    %400 = vmatpush1.msra.mxu0 0.0
    %401 = vmatprep.subr.mxu0 0.0
    %402 = vmatpush1.msra.mxu0 0.0
    %403 = vmatprep.subr.mxu0 0.0
    %404 = vmatpush1.msra.mxu0 0.0
    %405 = vmatprep.subr.mxu0 0.0
    %406 = vmatpush1.msra.mxu0 0.0
    %407 = vmatprep.subr.mxu0 0.0
    %408 = vmatpush1.msra.mxu0 0.0
    %409 = vmatprep.subr.mxu0 0.0
    %410 = vmatpush1.msra.mxu0 0.0
    %411 = vmatprep.subr.mxu0 0.0
    %412 = vmatpush1.msra.mxu0 0.0
    %413 = vmatprep.subr.mxu0 0.0
    %414 = vmatpush1.msra.mxu0 0.0
    %415 = vmatprep.subr.mxu0 0.0
    %416 = vmatpush1.msra.mxu0 0.0
    %417 = vmatprep.mubr.f32.mxu0 0.0
    %418 = vmatmul.mubr.f32.gmra.mrb[0].mxu0 %v245
    %v419 = vpop.f32.mrb[0].mxu0
    %v420 = vadd.f32 0.0, %v419
    %v421 = vpop.f32.mrb[0].mxu0
    %422 = vmatprep.mubr.f32.mxu0 0.0
    %423 = vmatmul.mubr.f32.gmra.mrb[0].mxu0 %v248
    %v424 = vpop.f32.mrb[0].mxu0
    %v425 = vadd.f32 0.0, %v424
    %v426 = vpop.f32.mrb[0].mxu0
    %427 = vmatprep.mubr.f32.mxu0 0.0
    %428 = vmatmul.mubr.f32.gmra.mrb[0].mxu0 %v251
    %v429 = vpop.f32.mrb[0].mxu0
    %v430 = vadd.f32 0.0, %v429
    %v431 = vpop.f32.mrb[0].mxu0
    %432 = vmatprep.mubr.f32.mxu0 0.0
    %433 = vmatmul.mubr.f32.gmra.mrb[0].mxu0 %v254
    %v434 = vpop.f32.mrb[0].mxu0
    %v435 = vadd.f32 0.0, %v434
    %v436 = vpop.f32.mrb[0].mxu0
    %437 = vdwg.mxu0
    %vm438 = vcmask 261120
    %v440 = vsel %vm438, %v203, 0
    %v443 = vsel %vm438, %v204, 0
    %v446 = vsel %vm438, %v205, 0
    %v449 = vsel %vm438, %v206, 0
    %451 = vmatprep.subr.mxu0 0.0
    %452 = vmatpush1.msra.mxu0 %v420
    %453 = vmatprep.subr.mxu0 0.0
    %454 = vmatpush1.msra.mxu0 %v425
    %455 = vmatprep.subr.mxu0 0.0
    %456 = vmatpush1.msra.mxu0 %v430
    %457 = vmatprep.subr.mxu0 0.0
    %458 = vmatpush1.msra.mxu0 %v435
    %459 = vmatprep.subr.mxu0 0.0
    %460 = vmatpush1.msra.mxu0 0.0
    %461 = vmatprep.subr.mxu0 0.0
    %462 = vmatpush1.msra.mxu0 0.0
    %463 = vmatprep.subr.mxu0 0.0
    %464 = vmatpush1.msra.mxu0 0.0
    %465 = vmatprep.subr.mxu0 0.0
    %466 = vmatpush1.msra.mxu0 0.0
    %467 = vmatprep.subr.mxu0 0.0
    %468 = vmatpush1.msra.mxu0 0.0
    %469 = vmatprep.subr.mxu0 0.0
    %470 = vmatpush1.msra.mxu0 0.0
    %471 = vmatprep.subr.mxu0 0.0
    %472 = vmatpush1.msra.mxu0 0.0
    %473 = vmatprep.subr.mxu0 0.0
    %474 = vmatpush1.msra.mxu0 0.0
    %475 = vmatprep.subr.mxu0 0.0
    %476 = vmatpush1.msra.mxu0 0.0
    %477 = vmatprep.subr.mxu0 0.0
    %478 = vmatpush1.msra.mxu0 0.0
    %479 = vmatprep.subr.mxu0 0.0
    %480 = vmatpush1.msra.mxu0 0.0
    %481 = vmatprep.subr.mxu0 0.0
    %482 = vmatpush1.msra.mxu0 0.0
    %483 = vmatprep.subr.mxu0 0.0
    %484 = vmatpush1.msra.mxu0 0.0
    %485 = vmatprep.subr.mxu0 0.0
    %486 = vmatpush1.msra.mxu0 0.0
    %487 = vmatprep.subr.mxu0 0.0
    %488 = vmatpush1.msra.mxu0 0.0
    %489 = vmatprep.subr.mxu0 0.0
    %490 = vmatpush1.msra.mxu0 0.0
    %491 = vmatprep.subr.mxu0 0.0
    %492 = vmatpush1.msra.mxu0 0.0
    %493 = vmatprep.subr.mxu0 0.0
    %494 = vmatpush1.msra.mxu0 0.0
    %495 = vmatprep.subr.mxu0 0.0
    %496 = vmatpush1.msra.mxu0 0.0
    %497 = vmatprep.subr.mxu0 0.0
    %498 = vmatpush1.msra.mxu0 0.0
    %499 = vmatprep.subr.mxu0 0.0
    %500 = vmatpush1.msra.mxu0 0.0
    %501 = vmatprep.subr.mxu0 0.0
    %502 = vmatpush1.msra.mxu0 0.0
    %503 = vmatprep.subr.mxu0 0.0
    %504 = vmatpush1.msra.mxu0 0.0
    %505 = vmatprep.subr.mxu0 0.0
    %506 = vmatpush1.msra.mxu0 0.0
    %507 = vmatprep.subr.mxu0 0.0
    %508 = vmatpush1.msra.mxu0 0.0
    %509 = vmatprep.subr.mxu0 0.0
    %510 = vmatpush1.msra.mxu0 0.0
    %511 = vmatprep.subr.mxu0 0.0
    %512 = vmatpush1.msra.mxu0 0.0
    %513 = vmatprep.subr.mxu0 0.0
    %514 = vmatpush1.msra.mxu0 0.0
    %515 = vmatprep.mubr.f32.mxu0 0.0
    %516 = vmatmul.mubr.f32.gmra.mrb[0].mxu0 %v440
    %v517 = vpop.f32.mrb[0].mxu0
    %v518 = vadd.f32 0.0, %v517
    %v519 = vpop.f32.mrb[0].mxu0
    %520 = vmatprep.mubr.f32.mxu0 0.0
    %521 = vmatmul.mubr.f32.gmra.mrb[0].mxu0 %v443
    %v522 = vpop.f32.mrb[0].mxu0
    %v523 = vadd.f32 0.0, %v522
    %v524 = vpop.f32.mrb[0].mxu0
    %525 = vmatprep.mubr.f32.mxu0 0.0
    %526 = vmatmul.mubr.f32.gmra.mrb[0].mxu0 %v446
    %v527 = vpop.f32.mrb[0].mxu0
    %v528 = vadd.f32 0.0, %v527
    %v529 = vpop.f32.mrb[0].mxu0
    %530 = vmatprep.mubr.f32.mxu0 0.0
    %531 = vmatmul.mubr.f32.gmra.mrb[0].mxu0 %v449
    %v532 = vpop.f32.mrb[0].mxu0
    %v533 = vadd.f32 0.0, %v532
    %v534 = vpop.f32.mrb[0].mxu0
    %535 = vdwg.mxu0
    %v536 = vadd.f32 %v323, %v518
    %v537 = vadd.f32 %v329, %v523
    %v538 = vadd.f32 %v335, %v528
    %v539 = vadd.f32 %v341, %v533
    %v540 = vld [vmem:[#allocation11] sm:$0xff]
    %v541 = vld [vmem:[#allocation11 + $0x8] sm:$0xff]
    %v542 = vld [vmem:[#allocation11 + $0x10] sm:$0xff]
    %v543 = vld [vmem:[#allocation11 + $0x18] sm:$0xff]
    %v544 = vld [vmem:[#allocation11 + $0x20] sm:$0xff]
    %v545 = vld [vmem:[#allocation11 + $0x28] sm:$0xff]
    %v546 = vld [vmem:[#allocation11 + $0x30] sm:$0xff]
    %v547 = vld [vmem:[#allocation11 + $0x38] sm:$0xff]
    %548 = vmatprep.subr.mxu0 0.0
    %549 = vmatpush1.msra.mxu0 %v540
    %550 = vmatprep.subr.mxu0 0.0
    %551 = vmatpush1.msra.mxu0 %v541
    %552 = vmatprep.subr.mxu0 0.0
    %553 = vmatpush1.msra.mxu0 %v542
    %554 = vmatprep.subr.mxu0 0.0
    %555 = vmatpush1.msra.mxu0 %v543
    %556 = vmatprep.subr.mxu0 0.0
    %557 = vmatpush1.msra.mxu0 %v544
    %558 = vmatprep.subr.mxu0 0.0
    %559 = vmatpush1.msra.mxu0 %v545
    %560 = vmatprep.subr.mxu0 0.0
    %561 = vmatpush1.msra.mxu0 %v546
    %562 = vmatprep.subr.mxu0 0.0
    %563 = vmatpush1.msra.mxu0 %v547
    %564 = vmatprep.subr.mxu0 0.0
    %565 = vmatpush1.msra.mxu0 0.0
    %566 = vmatprep.subr.mxu0 0.0
    %567 = vmatpush1.msra.mxu0 0.0
    %568 = vmatprep.subr.mxu0 0.0
    %569 = vmatpush1.msra.mxu0 0.0
    %570 = vmatprep.subr.mxu0 0.0
    %571 = vmatpush1.msra.mxu0 0.0
    %572 = vmatprep.subr.mxu0 0.0
    %573 = vmatpush1.msra.mxu0 0.0
    %574 = vmatprep.subr.mxu0 0.0
    %575 = vmatpush1.msra.mxu0 0.0
    %576 = vmatprep.subr.mxu0 0.0
    %577 = vmatpush1.msra.mxu0 0.0
    %578 = vmatprep.subr.mxu0 0.0
    %579 = vmatpush1.msra.mxu0 0.0
    %580 = vmatprep.subr.mxu0 0.0
    %581 = vmatpush1.msra.mxu0 0.0
    %582 = vmatprep.subr.mxu0 0.0
    %583 = vmatpush1.msra.mxu0 0.0
    %584 = vmatprep.subr.mxu0 0.0
    %585 = vmatpush1.msra.mxu0 0.0
    %586 = vmatprep.subr.mxu0 0.0
    %587 = vmatpush1.msra.mxu0 0.0
    %588 = vmatprep.subr.mxu0 0.0
    %589 = vmatpush1.msra.mxu0 0.0
    %590 = vmatprep.subr.mxu0 0.0
    %591 = vmatpush1.msra.mxu0 0.0
    %592 = vmatprep.subr.mxu0 0.0
    %593 = vmatpush1.msra.mxu0 0.0
    %594 = vmatprep.subr.mxu0 0.0
    %595 = vmatpush1.msra.mxu0 0.0
    %596 = vmatprep.subr.mxu0 0.0
    %597 = vmatpush1.msra.mxu0 0.0
    %598 = vmatprep.subr.mxu0 0.0
    %599 = vmatpush1.msra.mxu0 0.0
    %600 = vmatprep.subr.mxu0 0.0
    %601 = vmatpush1.msra.mxu0 0.0
    %602 = vmatprep.subr.mxu0 0.0
    %603 = vmatpush1.msra.mxu0 0.0
    %604 = vmatprep.subr.mxu0 0.0
    %605 = vmatpush1.msra.mxu0 0.0
    %606 = vmatprep.subr.mxu0 0.0
    %607 = vmatpush1.msra.mxu0 0.0
    %608 = vmatprep.subr.mxu0 0.0
    %609 = vmatpush1.msra.mxu0 0.0
    %610 = vmatprep.subr.mxu0 0.0
    %611 = vmatpush1.msra.mxu0 0.0
    %612 = vmatprep.mubr.f32.mxu0 0.0
    %613 = vmatmul.mubr.f32.gmra.mrb[0].mxu0 %v245
    %v614 = vpop.f32.mrb[0].mxu0
    %v615 = vadd.f32 0.0, %v614
    %v616 = vpop.f32.mrb[0].mxu0
    %617 = vmatprep.mubr.f32.mxu0 0.0
    %618 = vmatmul.mubr.f32.gmra.mrb[0].mxu0 %v248
    %v619 = vpop.f32.mrb[0].mxu0
    %v620 = vadd.f32 0.0, %v619
    %v621 = vpop.f32.mrb[0].mxu0
    %622 = vmatprep.mubr.f32.mxu0 0.0
    %623 = vmatmul.mubr.f32.gmra.mrb[0].mxu0 %v251
    %v624 = vpop.f32.mrb[0].mxu0
    %v625 = vadd.f32 0.0, %v624
    %v626 = vpop.f32.mrb[0].mxu0
    %627 = vmatprep.mubr.f32.mxu0 0.0
    %628 = vmatmul.mubr.f32.gmra.mrb[0].mxu0 %v254
    %v629 = vpop.f32.mrb[0].mxu0
    %v630 = vadd.f32 0.0, %v629
    %v631 = vpop.f32.mrb[0].mxu0
    %632 = vdwg.mxu0
    %v634 = vsel %vm438, %v207, 0
    %v637 = vsel %vm438, %v208, 0
    %v640 = vsel %vm438, %v209, 0
    %v643 = vsel %vm438, %v210, 0
    %645 = vmatprep.subr.mxu0 0.0
    %646 = vmatpush1.msra.mxu0 %v615
    %647 = vmatprep.subr.mxu0 0.0
    %648 = vmatpush1.msra.mxu0 %v620
    %649 = vmatprep.subr.mxu0 0.0
    %650 = vmatpush1.msra.mxu0 %v625
    %651 = vmatprep.subr.mxu0 0.0
    %652 = vmatpush1.msra.mxu0 %v630
    %653 = vmatprep.subr.mxu0 0.0
    %654 = vmatpush1.msra.mxu0 0.0
    %655 = vmatprep.subr.mxu0 0.0
    %656 = vmatpush1.msra.mxu0 0.0
    %657 = vmatprep.subr.mxu0 0.0
    %658 = vmatpush1.msra.mxu0 0.0
    %659 = vmatprep.subr.mxu0 0.0
    %660 = vmatpush1.msra.mxu0 0.0
    %661 = vmatprep.subr.mxu0 0.0
    %662 = vmatpush1.msra.mxu0 0.0
    %663 = vmatprep.subr.mxu0 0.0
    %664 = vmatpush1.msra.mxu0 0.0
    %665 = vmatprep.subr.mxu0 0.0
    %666 = vmatpush1.msra.mxu0 0.0
    %667 = vmatprep.subr.mxu0 0.0
    %668 = vmatpush1.msra.mxu0 0.0
    %669 = vmatprep.subr.mxu0 0.0
    %670 = vmatpush1.msra.mxu0 0.0
    %671 = vmatprep.subr.mxu0 0.0
    %672 = vmatpush1.msra.mxu0 0.0
    %673 = vmatprep.subr.mxu0 0.0
    %674 = vmatpush1.msra.mxu0 0.0
    %675 = vmatprep.subr.mxu0 0.0
    %676 = vmatpush1.msra.mxu0 0.0
    %677 = vmatprep.subr.mxu0 0.0
    %678 = vmatpush1.msra.mxu0 0.0
    %679 = vmatprep.subr.mxu0 0.0
    %680 = vmatpush1.msra.mxu0 0.0
    %681 = vmatprep.subr.mxu0 0.0
    %682 = vmatpush1.msra.mxu0 0.0
    %683 = vmatprep.subr.mxu0 0.0
    %684 = vmatpush1.msra.mxu0 0.0
    %685 = vmatprep.subr.mxu0 0.0
    %686 = vmatpush1.msra.mxu0 0.0
    %687 = vmatprep.subr.mxu0 0.0
    %688 = vmatpush1.msra.mxu0 0.0
    %689 = vmatprep.subr.mxu0 0.0
    %690 = vmatpush1.msra.mxu0 0.0
    %691 = vmatprep.subr.mxu0 0.0
    %692 = vmatpush1.msra.mxu0 0.0
    %693 = vmatprep.subr.mxu0 0.0
    %694 = vmatpush1.msra.mxu0 0.0
    %695 = vmatprep.subr.mxu0 0.0
    %696 = vmatpush1.msra.mxu0 0.0
    %697 = vmatprep.subr.mxu0 0.0
    %698 = vmatpush1.msra.mxu0 0.0
    %699 = vmatprep.subr.mxu0 0.0
    %700 = vmatpush1.msra.mxu0 0.0
    %701 = vmatprep.subr.mxu0 0.0
    %702 = vmatpush1.msra.mxu0 0.0
    %703 = vmatprep.subr.mxu0 0.0
    %704 = vmatpush1.msra.mxu0 0.0
    %705 = vmatprep.subr.mxu0 0.0
    %706 = vmatpush1.msra.mxu0 0.0
    %707 = vmatprep.subr.mxu0 0.0
    %708 = vmatpush1.msra.mxu0 0.0
    %709 = vmatprep.mubr.f32.mxu0 0.0
    %710 = vmatmul.mubr.f32.gmra.mrb[0].mxu0 %v634
    %v711 = vpop.f32.mrb[0].mxu0
    %v712 = vadd.f32 0.0, %v711
    %v713 = vpop.f32.mrb[0].mxu0
    %714 = vmatprep.mubr.f32.mxu0 0.0
    %715 = vmatmul.mubr.f32.gmra.mrb[0].mxu0 %v637
    %v716 = vpop.f32.mrb[0].mxu0
    %v717 = vadd.f32 0.0, %v716
    %v718 = vpop.f32.mrb[0].mxu0
    %719 = vmatprep.mubr.f32.mxu0 0.0
    %720 = vmatmul.mubr.f32.gmra.mrb[0].mxu0 %v640
    %v721 = vpop.f32.mrb[0].mxu0
    %v722 = vadd.f32 0.0, %v721
    %v723 = vpop.f32.mrb[0].mxu0
    %724 = vmatprep.mubr.f32.mxu0 0.0
    %725 = vmatmul.mubr.f32.gmra.mrb[0].mxu0 %v643
    %v726 = vpop.f32.mrb[0].mxu0
    %v727 = vadd.f32 0.0, %v726
    %v728 = vpop.f32.mrb[0].mxu0
    %729 = vdwg.mxu0
    %v730 = vadd.f32 %v536, %v712
    %v731 = vadd.f32 %v537, %v717
    %v732 = vadd.f32 %v538, %v722
    %v733 = vadd.f32 %v539, %v727
    %v734 = vld [vmem:[%s10] sm:$0x1]
    %v736 = vlaneseq
    %v737 = vshrl.u32 %v736, 7
    %v738 = vsub.s32 0, %v737
    %v739 = vrot.slane %v734, %v738
    %v741 = vadd.f32 %v730, %v739
    %v742 = vadd.f32 %v731, %v739
    %v743 = vadd.f32 %v732, %v739
    %v744 = vadd.f32 %v733, %v739
    %v745 = vld [vmem:[%s11] sm:$0x1]
    %v746 = vld [vmem:[%s12] sm:$0x1]
    %747 = vmatprep.subr.mxu0 0.0
    %748 = vmatpush1.msra.mxu0 %v211
    %749 = vmatprep.subr.mxu0 0.0
    %750 = vmatpush1.msra.mxu0 %v212
    %751 = vmatprep.subr.mxu0 0.0
    %752 = vmatpush1.msra.mxu0 %v213
    %753 = vmatprep.subr.mxu0 0.0
    %754 = vmatpush1.msra.mxu0 %v214
    %755 = vmatprep.subr.mxu0 0.0
    %756 = vmatpush1.msra.mxu0 %v215
    %757 = vmatprep.subr.mxu0 0.0
    %758 = vmatpush1.msra.mxu0 %v216
    %759 = vmatprep.subr.mxu0 0.0
    %760 = vmatpush1.msra.mxu0 %v217
    %761 = vmatprep.subr.mxu0 0.0
    %762 = vmatpush1.msra.mxu0 %v218
    %763 = vmatprep.subr.mxu0 0.0
    %764 = vmatpush1.msra.mxu0 %v219
    %765 = vmatprep.subr.mxu0 0.0
    %766 = vmatpush1.msra.mxu0 %v220
    %767 = vmatprep.subr.mxu0 0.0
    %768 = vmatpush1.msra.mxu0 %v221
    %769 = vmatprep.subr.mxu0 0.0
    %770 = vmatpush1.msra.mxu0 %v222
    %771 = vmatprep.subr.mxu0 0.0
    %772 = vmatpush1.msra.mxu0 %v223
    %773 = vmatprep.subr.mxu0 0.0
    %774 = vmatpush1.msra.mxu0 %v224
    %775 = vmatprep.subr.mxu0 0.0
    %776 = vmatpush1.msra.mxu0 %v225
    %777 = vmatprep.subr.mxu0 0.0
    %778 = vmatpush1.msra.mxu0 %v226
    %779 = vmatprep.subr.mxu0 0.0
    %780 = vmatpush1.msra.mxu0 0.0
    %781 = vmatprep.subr.mxu0 0.0
    %782 = vmatpush1.msra.mxu0 0.0
    %783 = vmatprep.subr.mxu0 0.0
    %784 = vmatpush1.msra.mxu0 0.0
    %785 = vmatprep.subr.mxu0 0.0
    %786 = vmatpush1.msra.mxu0 0.0
    %787 = vmatprep.subr.mxu0 0.0
    %788 = vmatpush1.msra.mxu0 0.0
    %789 = vmatprep.subr.mxu0 0.0
    %790 = vmatpush1.msra.mxu0 0.0
    %791 = vmatprep.subr.mxu0 0.0
    %792 = vmatpush1.msra.mxu0 0.0
    %793 = vmatprep.subr.mxu0 0.0
    %794 = vmatpush1.msra.mxu0 0.0
    %795 = vmatprep.subr.mxu0 0.0
    %796 = vmatpush1.msra.mxu0 0.0
    %797 = vmatprep.subr.mxu0 0.0
    %798 = vmatpush1.msra.mxu0 0.0
    %799 = vmatprep.subr.mxu0 0.0
    %800 = vmatpush1.msra.mxu0 0.0
    %801 = vmatprep.subr.mxu0 0.0
    %802 = vmatpush1.msra.mxu0 0.0
    %803 = vmatprep.subr.mxu0 0.0
    %804 = vmatpush1.msra.mxu0 0.0
    %805 = vmatprep.subr.mxu0 0.0
    %806 = vmatpush1.msra.mxu0 0.0
    %807 = vmatprep.subr.mxu0 0.0
    %808 = vmatpush1.msra.mxu0 0.0
    %809 = vmatprep.subr.mxu0 0.0
    %810 = vmatpush1.msra.mxu0 0.0
    %811 = vmatprep.mubr.f32.mxu0 0.0
    %812 = vmatmul.mubr.f32.gmra.mrb[0].mxu0 %v741
    %v813 = vpop.f32.mrb[0].mxu0
    %v814 = vadd.f32 0.0, %v813
    %v815 = vpop.f32.mrb[0].mxu0
    %816 = vmatprep.mubr.f32.mxu0 0.0
    %817 = vmatmul.mubr.f32.gmra.mrb[0].mxu0 %v742
    %v818 = vpop.f32.mrb[0].mxu0
    %v819 = vadd.f32 0.0, %v818
    %v820 = vpop.f32.mrb[0].mxu0
    %821 = vmatprep.mubr.f32.mxu0 0.0
    %822 = vmatmul.mubr.f32.gmra.mrb[0].mxu0 %v743
    %v823 = vpop.f32.mrb[0].mxu0
    %v824 = vadd.f32 0.0, %v823
    %v825 = vpop.f32.mrb[0].mxu0
    %826 = vmatprep.mubr.f32.mxu0 0.0
    %827 = vmatmul.mubr.f32.gmra.mrb[0].mxu0 %v744
    %v828 = vpop.f32.mrb[0].mxu0
    %v829 = vadd.f32 0.0, %v828
    %v830 = vpop.f32.mrb[0].mxu0
    %831 = vdwg.mxu0
    %v832 = vadd.f32 %v814, %v819
    %v833 = vadd.f32 %v832, %v824
    %v834 = vadd.f32 %v833, %v829
    %v835 = vrot.slane %v834, 4
    %v836 = vadd.f32 %v834, %v835
    %v837 = vrot.slane %v836, 2
    %v838 = vadd.f32 %v836, %v837
    %v839 = vrot.slane %v838, 1
    %v840 = vadd.f32 %v838, %v839
    %v841 = vmul.f32 %v840, 0.001953125
    %v842 = vmul.f32 %v741, %v741
    %v843 = vmul.f32 %v742, %v742
    %v844 = vmul.f32 %v743, %v743
    %v845 = vmul.f32 %v744, %v744
    %846 = vmatprep.subr.mxu0 0.0
    %847 = vmatpush1.msra.mxu0 %v211
    %848 = vmatprep.subr.mxu0 0.0
    %849 = vmatpush1.msra.mxu0 %v212
    %850 = vmatprep.subr.mxu0 0.0
    %851 = vmatpush1.msra.mxu0 %v213
    %852 = vmatprep.subr.mxu0 0.0
    %853 = vmatpush1.msra.mxu0 %v214
    %854 = vmatprep.subr.mxu0 0.0
    %855 = vmatpush1.msra.mxu0 %v215
    %856 = vmatprep.subr.mxu0 0.0
    %857 = vmatpush1.msra.mxu0 %v216
    %858 = vmatprep.subr.mxu0 0.0
    %859 = vmatpush1.msra.mxu0 %v217
    %860 = vmatprep.subr.mxu0 0.0
    %861 = vmatpush1.msra.mxu0 %v218
    %862 = vmatprep.subr.mxu0 0.0
    %863 = vmatpush1.msra.mxu0 %v219
    %864 = vmatprep.subr.mxu0 0.0
    %865 = vmatpush1.msra.mxu0 %v220
    %866 = vmatprep.subr.mxu0 0.0
    %867 = vmatpush1.msra.mxu0 %v221
    %868 = vmatprep.subr.mxu0 0.0
    %869 = vmatpush1.msra.mxu0 %v222
    %870 = vmatprep.subr.mxu0 0.0
    %871 = vmatpush1.msra.mxu0 %v223
    %872 = vmatprep.subr.mxu0 0.0
    %873 = vmatpush1.msra.mxu0 %v224
    %874 = vmatprep.subr.mxu0 0.0
    %875 = vmatpush1.msra.mxu0 %v225
    %876 = vmatprep.subr.mxu0 0.0
    %877 = vmatpush1.msra.mxu0 %v226
    %878 = vmatprep.subr.mxu0 0.0
    %879 = vmatpush1.msra.mxu0 0.0
    %880 = vmatprep.subr.mxu0 0.0
    %881 = vmatpush1.msra.mxu0 0.0
    %882 = vmatprep.subr.mxu0 0.0
    %883 = vmatpush1.msra.mxu0 0.0
    %884 = vmatprep.subr.mxu0 0.0
    %885 = vmatpush1.msra.mxu0 0.0
    %886 = vmatprep.subr.mxu0 0.0
    %887 = vmatpush1.msra.mxu0 0.0
    %888 = vmatprep.subr.mxu0 0.0
    %889 = vmatpush1.msra.mxu0 0.0
    %890 = vmatprep.subr.mxu0 0.0
    %891 = vmatpush1.msra.mxu0 0.0
    %892 = vmatprep.subr.mxu0 0.0
    %893 = vmatpush1.msra.mxu0 0.0
    %894 = vmatprep.subr.mxu0 0.0
    %895 = vmatpush1.msra.mxu0 0.0
    %896 = vmatprep.subr.mxu0 0.0
    %897 = vmatpush1.msra.mxu0 0.0
    %898 = vmatprep.subr.mxu0 0.0
    %899 = vmatpush1.msra.mxu0 0.0
    %900 = vmatprep.subr.mxu0 0.0
    %901 = vmatpush1.msra.mxu0 0.0
    %902 = vmatprep.subr.mxu0 0.0
    %903 = vmatpush1.msra.mxu0 0.0
    %904 = vmatprep.subr.mxu0 0.0
    %905 = vmatpush1.msra.mxu0 0.0
    %906 = vmatprep.subr.mxu0 0.0
    %907 = vmatpush1.msra.mxu0 0.0
    %908 = vmatprep.subr.mxu0 0.0
    %909 = vmatpush1.msra.mxu0 0.0
    %910 = vmatprep.mubr.f32.mxu0 0.0
    %911 = vmatmul.mubr.f32.gmra.mrb[0].mxu0 %v842
    %v912 = vpop.f32.mrb[0].mxu0
    %v913 = vadd.f32 0.0, %v912
    %v914 = vpop.f32.mrb[0].mxu0
    %915 = vmatprep.mubr.f32.mxu0 0.0
    %916 = vmatmul.mubr.f32.gmra.mrb[0].mxu0 %v843
    %v917 = vpop.f32.mrb[0].mxu0
    %v918 = vadd.f32 0.0, %v917
    %v919 = vpop.f32.mrb[0].mxu0
    %920 = vmatprep.mubr.f32.mxu0 0.0
    %921 = vmatmul.mubr.f32.gmra.mrb[0].mxu0 %v844
    %v922 = vpop.f32.mrb[0].mxu0
    %v923 = vadd.f32 0.0, %v922
    %v924 = vpop.f32.mrb[0].mxu0
    %925 = vmatprep.mubr.f32.mxu0 0.0
    %926 = vmatmul.mubr.f32.gmra.mrb[0].mxu0 %v845
    %v927 = vpop.f32.mrb[0].mxu0
    %v928 = vadd.f32 0.0, %v927
    %v929 = vpop.f32.mrb[0].mxu0
    %930 = vdwg.mxu0
    %v931 = vadd.f32 %v913, %v918
    %v932 = vadd.f32 %v931, %v923
    %v933 = vadd.f32 %v932, %v928
    %v934 = vrot.slane %v933, 4
    %v935 = vadd.f32 %v933, %v934
    %v936 = vrot.slane %v935, 2
    %v937 = vadd.f32 %v935, %v936
    %v938 = vrot.slane %v937, 1
    %v939 = vadd.f32 %v937, %v938
    %v940 = vmul.f32 %v939, 0.001953125
    %v941 = vmul.f32 %v841, %v841
    %v942 = vsub.f32 %v940, %v941
    %v943 = vsub.f32 %v741, %v841
    %v944 = vsub.f32 %v742, %v841
    %v945 = vsub.f32 %v743, %v841
    %v946 = vsub.f32 %v744, %v841
    %v947 = vadd.f32 %v942, 1e-05
    %v948 = vrsqrt.pop %v947
    %v949 = vmul.f32 %v948, %v745
    %v950 = vlaneseq
    %v951 = vshrl.u32 %v950, 7
    %v952 = vsub.s32 0, %v951
    %v953 = vrot.slane %v949, %v952
    %v954 = vmul.f32 %v943, %v953
    %v955 = vmul.f32 %v944, %v953
    %v956 = vmul.f32 %v945, %v953
    %v957 = vmul.f32 %v946, %v953
    %v959 = vlaneseq
    %v960 = vshrl.u32 %v959, 7
    %v961 = vsub.s32 0, %v960
    %v962 = vrot.slane %v746, %v961
    %v964 = vadd.f32 %v954, %v962
    %v965 = vadd.f32 %v955, %v962
    %v966 = vadd.f32 %v956, %v962
    %v967 = vadd.f32 %v957, %v962
    %v968 = vsub.f32 0.0, %v964
    %v969 = vsub.f32 0.0, %v965
    %v970 = vsub.f32 0.0, %v966
    %v971 = vsub.f32 0.0, %v967
    %v972 = vmul.f32 %v968, 1.442695
    %v973 = vpow.pop %v972
    %v974 = vmul.f32 %v969, 1.442695
    %v975 = vpow.pop %v974
    %v976 = vmul.f32 %v970, 1.442695
    %v977 = vpow.pop %v976
    %v978 = vmul.f32 %v971, 1.442695
    %v979 = vpow.pop %v978
    %v980 = vadd.f32 %v973, 1.0
    %v981 = vadd.f32 %v975, 1.0
    %v982 = vadd.f32 %v977, 1.0
    %v983 = vadd.f32 %v979, 1.0
    %v984 = vrcp.pop %v980
    %v985 = vrcp.pop %v981
    %v986 = vrcp.pop %v982
    %v987 = vrcp.pop %v983
    %v988 = vmul.f32 %v964, %v984
    %v989 = vmul.f32 %v965, %v985
    %v990 = vmul.f32 %v966, %v986
    %v991 = vmul.f32 %v967, %v987
    %v992 = vld [vmem:[%s16] sm:$0x1]
    %v994 = vlaneseq
    %v995 = vshrl.u32 %v994, 7
    %v996 = vsub.s32 0, %v995
    %v997 = vrot.slane %v992, %v996
    %v999 = vadd.f32 %v325, %v997
    %v1000 = vadd.f32 %v331, %v997
    %v1001 = vadd.f32 %v337, %v997
    %v1002 = vadd.f32 %v343, %v997
    %v1003 = vld [vmem:[%s17] sm:$0x1]
    %v1004 = vld [vmem:[%s18] sm:$0x1]
    %1005 = vmatprep.subr.mxu0 0.0
    %1006 = vmatpush1.msra.mxu0 %v211
    %1007 = vmatprep.subr.mxu0 0.0
    %1008 = vmatpush1.msra.mxu0 %v212
    %1009 = vmatprep.subr.mxu0 0.0
    %1010 = vmatpush1.msra.mxu0 %v213
    %1011 = vmatprep.subr.mxu0 0.0
    %1012 = vmatpush1.msra.mxu0 %v214
    %1013 = vmatprep.subr.mxu0 0.0
    %1014 = vmatpush1.msra.mxu0 %v215
    %1015 = vmatprep.subr.mxu0 0.0
    %1016 = vmatpush1.msra.mxu0 %v216
    %1017 = vmatprep.subr.mxu0 0.0
    %1018 = vmatpush1.msra.mxu0 %v217
    %1019 = vmatprep.subr.mxu0 0.0
    %1020 = vmatpush1.msra.mxu0 %v218
    %1021 = vmatprep.subr.mxu0 0.0
    %1022 = vmatpush1.msra.mxu0 %v219
    %1023 = vmatprep.subr.mxu0 0.0
    %1024 = vmatpush1.msra.mxu0 %v220
    %1025 = vmatprep.subr.mxu0 0.0
    %1026 = vmatpush1.msra.mxu0 %v221
    %1027 = vmatprep.subr.mxu0 0.0
    %1028 = vmatpush1.msra.mxu0 %v222
    %1029 = vmatprep.subr.mxu0 0.0
    %1030 = vmatpush1.msra.mxu0 %v223
    %1031 = vmatprep.subr.mxu0 0.0
    %1032 = vmatpush1.msra.mxu0 %v224
    %1033 = vmatprep.subr.mxu0 0.0
    %1034 = vmatpush1.msra.mxu0 %v225
    %1035 = vmatprep.subr.mxu0 0.0
    %1036 = vmatpush1.msra.mxu0 %v226
    %1037 = vmatprep.subr.mxu0 0.0
    %1038 = vmatpush1.msra.mxu0 0.0
    %1039 = vmatprep.subr.mxu0 0.0
    %1040 = vmatpush1.msra.mxu0 0.0
    %1041 = vmatprep.subr.mxu0 0.0
    %1042 = vmatpush1.msra.mxu0 0.0
    %1043 = vmatprep.subr.mxu0 0.0
    %1044 = vmatpush1.msra.mxu0 0.0
    %1045 = vmatprep.subr.mxu0 0.0
    %1046 = vmatpush1.msra.mxu0 0.0
    %1047 = vmatprep.subr.mxu0 0.0
    %1048 = vmatpush1.msra.mxu0 0.0
    %1049 = vmatprep.subr.mxu0 0.0
    %1050 = vmatpush1.msra.mxu0 0.0
    %1051 = vmatprep.subr.mxu0 0.0
    %1052 = vmatpush1.msra.mxu0 0.0
    %1053 = vmatprep.subr.mxu0 0.0
    %1054 = vmatpush1.msra.mxu0 0.0
    %1055 = vmatprep.subr.mxu0 0.0
    %1056 = vmatpush1.msra.mxu0 0.0
    %1057 = vmatprep.subr.mxu0 0.0
    %1058 = vmatpush1.msra.mxu0 0.0
    %1059 = vmatprep.subr.mxu0 0.0
    %1060 = vmatpush1.msra.mxu0 0.0
    %1061 = vmatprep.subr.mxu0 0.0
    %1062 = vmatpush1.msra.mxu0 0.0
    %1063 = vmatprep.subr.mxu0 0.0
    %1064 = vmatpush1.msra.mxu0 0.0
    %1065 = vmatprep.subr.mxu0 0.0
    %1066 = vmatpush1.msra.mxu0 0.0
    %1067 = vmatprep.subr.mxu0 0.0
    %1068 = vmatpush1.msra.mxu0 0.0
    %1069 = vmatprep.mubr.f32.mxu0 0.0
    %1070 = vmatmul.mubr.f32.gmra.mrb[0].mxu0 %v999
    %v1071 = vpop.f32.mrb[0].mxu0
    %v1072 = vadd.f32 0.0, %v1071
    %v1073 = vpop.f32.mrb[0].mxu0
    %1074 = vmatprep.mubr.f32.mxu0 0.0
    %1075 = vmatmul.mubr.f32.gmra.mrb[0].mxu0 %v1000
    %v1076 = vpop.f32.mrb[0].mxu0
    %v1077 = vadd.f32 0.0, %v1076
    %v1078 = vpop.f32.mrb[0].mxu0
    %1079 = vmatprep.mubr.f32.mxu0 0.0
    %1080 = vmatmul.mubr.f32.gmra.mrb[0].mxu0 %v1001
    %v1081 = vpop.f32.mrb[0].mxu0
    %v1082 = vadd.f32 0.0, %v1081
    %v1083 = vpop.f32.mrb[0].mxu0
    %1084 = vmatprep.mubr.f32.mxu0 0.0
    %1085 = vmatmul.mubr.f32.gmra.mrb[0].mxu0 %v1002
    %v1086 = vpop.f32.mrb[0].mxu0
    %v1087 = vadd.f32 0.0, %v1086
    %v1088 = vpop.f32.mrb[0].mxu0
    %1089 = vdwg.mxu0
    %v1090 = vadd.f32 %v1072, %v1077
    %v1091 = vadd.f32 %v1090, %v1082
    %v1092 = vadd.f32 %v1091, %v1087
    %v1093 = vrot.slane %v1092, 4
    %v1094 = vadd.f32 %v1092, %v1093
    %v1095 = vrot.slane %v1094, 2
    %v1096 = vadd.f32 %v1094, %v1095
    %v1097 = vrot.slane %v1096, 1
    %v1098 = vadd.f32 %v1096, %v1097
    %v1099 = vmul.f32 %v1098, 0.001953125
    %v1100 = vmul.f32 %v999, %v999
    %v1101 = vmul.f32 %v1000, %v1000
    %v1102 = vmul.f32 %v1001, %v1001
    %v1103 = vmul.f32 %v1002, %v1002
    %1104 = vmatprep.subr.mxu0 0.0
    %1105 = vmatpush1.msra.mxu0 %v211
    %1106 = vmatprep.subr.mxu0 0.0
    %1107 = vmatpush1.msra.mxu0 %v212
    %1108 = vmatprep.subr.mxu0 0.0
    %1109 = vmatpush1.msra.mxu0 %v213
    %1110 = vmatprep.subr.mxu0 0.0
    %1111 = vmatpush1.msra.mxu0 %v214
    %1112 = vmatprep.subr.mxu0 0.0
    %1113 = vmatpush1.msra.mxu0 %v215
    %1114 = vmatprep.subr.mxu0 0.0
    %1115 = vmatpush1.msra.mxu0 %v216
    %1116 = vmatprep.subr.mxu0 0.0
    %1117 = vmatpush1.msra.mxu0 %v217
    %1118 = vmatprep.subr.mxu0 0.0
    %1119 = vmatpush1.msra.mxu0 %v218
    %1120 = vmatprep.subr.mxu0 0.0
    %1121 = vmatpush1.msra.mxu0 %v219
    %1122 = vmatprep.subr.mxu0 0.0
    %1123 = vmatpush1.msra.mxu0 %v220
    %1124 = vmatprep.subr.mxu0 0.0
    %1125 = vmatpush1.msra.mxu0 %v221
    %1126 = vmatprep.subr.mxu0 0.0
    %1127 = vmatpush1.msra.mxu0 %v222
    %1128 = vmatprep.subr.mxu0 0.0
    %1129 = vmatpush1.msra.mxu0 %v223
    %1130 = vmatprep.subr.mxu0 0.0
    %1131 = vmatpush1.msra.mxu0 %v224
    %1132 = vmatprep.subr.mxu0 0.0
    %1133 = vmatpush1.msra.mxu0 %v225
    %1134 = vmatprep.subr.mxu0 0.0
    %1135 = vmatpush1.msra.mxu0 %v226
    %1136 = vmatprep.subr.mxu0 0.0
    %1137 = vmatpush1.msra.mxu0 0.0
    %1138 = vmatprep.subr.mxu0 0.0
    %1139 = vmatpush1.msra.mxu0 0.0
    %1140 = vmatprep.subr.mxu0 0.0
    %1141 = vmatpush1.msra.mxu0 0.0
    %1142 = vmatprep.subr.mxu0 0.0
    %1143 = vmatpush1.msra.mxu0 0.0
    %1144 = vmatprep.subr.mxu0 0.0
    %1145 = vmatpush1.msra.mxu0 0.0
    %1146 = vmatprep.subr.mxu0 0.0
    %1147 = vmatpush1.msra.mxu0 0.0
    %1148 = vmatprep.subr.mxu0 0.0
    %1149 = vmatpush1.msra.mxu0 0.0
    %1150 = vmatprep.subr.mxu0 0.0
    %1151 = vmatpush1.msra.mxu0 0.0
    %1152 = vmatprep.subr.mxu0 0.0
    %1153 = vmatpush1.msra.mxu0 0.0
    %1154 = vmatprep.subr.mxu0 0.0
    %1155 = vmatpush1.msra.mxu0 0.0
    %1156 = vmatprep.subr.mxu0 0.0
    %1157 = vmatpush1.msra.mxu0 0.0
    %1158 = vmatprep.subr.mxu0 0.0
    %1159 = vmatpush1.msra.mxu0 0.0
    %1160 = vmatprep.subr.mxu0 0.0
    %1161 = vmatpush1.msra.mxu0 0.0
    %1162 = vmatprep.subr.mxu0 0.0
    %1163 = vmatpush1.msra.mxu0 0.0
    %1164 = vmatprep.subr.mxu0 0.0
    %1165 = vmatpush1.msra.mxu0 0.0
    %1166 = vmatprep.subr.mxu0 0.0
    %1167 = vmatpush1.msra.mxu0 0.0
    %1168 = vmatprep.mubr.f32.mxu0 0.0
    %1169 = vmatmul.mubr.f32.gmra.mrb[0].mxu0 %v1100
    %v1170 = vpop.f32.mrb[0].mxu0
    %v1171 = vadd.f32 0.0, %v1170
    %v1172 = vpop.f32.mrb[0].mxu0
    %1173 = vmatprep.mubr.f32.mxu0 0.0
    %1174 = vmatmul.mubr.f32.gmra.mrb[0].mxu0 %v1101
    %v1175 = vpop.f32.mrb[0].mxu0
    %v1176 = vadd.f32 0.0, %v1175
    %v1177 = vpop.f32.mrb[0].mxu0
    %1178 = vmatprep.mubr.f32.mxu0 0.0
    %1179 = vmatmul.mubr.f32.gmra.mrb[0].mxu0 %v1102
    %v1180 = vpop.f32.mrb[0].mxu0
    %v1181 = vadd.f32 0.0, %v1180
    %v1182 = vpop.f32.mrb[0].mxu0
    %1183 = vmatprep.mubr.f32.mxu0 0.0
    %1184 = vmatmul.mubr.f32.gmra.mrb[0].mxu0 %v1103
    %v1185 = vpop.f32.mrb[0].mxu0
    %v1186 = vadd.f32 0.0, %v1185
    %v1187 = vpop.f32.mrb[0].mxu0
    %1188 = vdwg.mxu0
    %v1189 = vadd.f32 %v1171, %v1176
    %v1190 = vadd.f32 %v1189, %v1181
    %v1191 = vadd.f32 %v1190, %v1186
    %v1192 = vrot.slane %v1191, 4
    %v1193 = vadd.f32 %v1191, %v1192
    %v1194 = vrot.slane %v1193, 2
    %v1195 = vadd.f32 %v1193, %v1194
    %v1196 = vrot.slane %v1195, 1
    %v1197 = vadd.f32 %v1195, %v1196
    %v1198 = vmul.f32 %v1197, 0.001953125
    %v1199 = vmul.f32 %v1099, %v1099
    %v1200 = vsub.f32 %v1198, %v1199
    %v1201 = vsub.f32 %v999, %v1099
    %v1202 = vsub.f32 %v1000, %v1099
    %v1203 = vsub.f32 %v1001, %v1099
    %v1204 = vsub.f32 %v1002, %v1099
    %v1205 = vadd.f32 %v1200, 1e-05
    %v1206 = vrsqrt.pop %v1205
    %v1207 = vmul.f32 %v1206, %v1003
    %v1208 = vlaneseq
    %v1209 = vshrl.u32 %v1208, 7
    %v1210 = vsub.s32 0, %v1209
    %v1211 = vrot.slane %v1207, %v1210
    %v1212 = vmul.f32 %v1201, %v1211
    %v1213 = vmul.f32 %v1202, %v1211
    %v1214 = vmul.f32 %v1203, %v1211
    %v1215 = vmul.f32 %v1204, %v1211
    %v1217 = vlaneseq
    %v1218 = vshrl.u32 %v1217, 7
    %v1219 = vsub.s32 0, %v1218
    %v1220 = vrot.slane %v1004, %v1219
    %v1222 = vadd.f32 %v1212, %v1220
    %v1223 = vadd.f32 %v1213, %v1220
    %v1224 = vadd.f32 %v1214, %v1220
    %v1225 = vadd.f32 %v1215, %v1220
    %v1226 = vld [vmem:[#allocation14] sm:$0xff]
    %v1227 = vld [vmem:[#allocation14 + $0x8] sm:$0xff]
    %v1228 = vld [vmem:[#allocation14 + $0x10] sm:$0xff]
    %v1229 = vld [vmem:[#allocation14 + $0x18] sm:$0xff]
    %v1230 = vld [vmem:[#allocation14 + $0x20] sm:$0xff]
    %v1231 = vld [vmem:[#allocation14 + $0x28] sm:$0xff]
    %v1232 = vld [vmem:[#allocation14 + $0x30] sm:$0xff]
    %v1233 = vld [vmem:[#allocation14 + $0x38] sm:$0xff]
    %v1234 = vld [vmem:[#allocation14 + $0x40] sm:$0xff]
    %v1235 = vld [vmem:[#allocation14 + $0x48] sm:$0xff]
    %v1236 = vld [vmem:[#allocation14 + $0x50] sm:$0xff]
    %v1237 = vld [vmem:[#allocation14 + $0x58] sm:$0xff]
    %v1238 = vld [vmem:[#allocation14 + $0x60] sm:$0xff]
    %v1239 = vld [vmem:[#allocation14 + $0x68] sm:$0xff]
    %v1240 = vld [vmem:[#allocation14 + $0x70] sm:$0xff]
    %v1241 = vld [vmem:[#allocation14 + $0x78] sm:$0xff]
    %v1242 = vld [vmem:[#allocation13] sm:$0xff]
    %v1243 = vld [vmem:[#allocation13 + $0x8] sm:$0xff]
    %v1244 = vld [vmem:[#allocation13 + $0x10] sm:$0xff]
    %v1245 = vld [vmem:[#allocation13 + $0x18] sm:$0xff]
    %v1246 = vld [vmem:[#allocation13 + $0x20] sm:$0xff]
    %v1247 = vld [vmem:[#allocation13 + $0x28] sm:$0xff]
    %v1248 = vld [vmem:[#allocation13 + $0x30] sm:$0xff]
    %v1249 = vld [vmem:[#allocation13 + $0x38] sm:$0xff]
    %v1250 = vld [vmem:[#allocation13 + $0x40] sm:$0xff]
    %v1251 = vld [vmem:[#allocation13 + $0x48] sm:$0xff]
    %v1252 = vld [vmem:[#allocation13 + $0x50] sm:$0xff]
    %v1253 = vld [vmem:[#allocation13 + $0x58] sm:$0xff]
    %v1254 = vld [vmem:[#allocation13 + $0x60] sm:$0xff]
    %v1255 = vld [vmem:[#allocation13 + $0x68] sm:$0xff]
    %v1256 = vld [vmem:[#allocation13 + $0x70] sm:$0xff]
    %v1257 = vld [vmem:[#allocation13 + $0x78] sm:$0xff]
    %1258 = vmatprep.subr.mxu0 0.0
    %1259 = vmatpush1.msra.mxu0 %v1242
    %1260 = vmatprep.subr.mxu0 0.0
    %1261 = vmatpush1.msra.mxu0 %v1243
    %1262 = vmatprep.subr.mxu0 0.0
    %1263 = vmatpush1.msra.mxu0 %v1244
    %1264 = vmatprep.subr.mxu0 0.0
    %1265 = vmatpush1.msra.mxu0 %v1245
    %1266 = vmatprep.subr.mxu0 0.0
    %1267 = vmatpush1.msra.mxu0 %v1246
    %1268 = vmatprep.subr.mxu0 0.0
    %1269 = vmatpush1.msra.mxu0 %v1247
    %1270 = vmatprep.subr.mxu0 0.0
    %1271 = vmatpush1.msra.mxu0 %v1248
    %1272 = vmatprep.subr.mxu0 0.0
    %1273 = vmatpush1.msra.mxu0 %v1249
    %1274 = vmatprep.subr.mxu0 0.0
    %1275 = vmatpush1.msra.mxu0 %v1250
    %1276 = vmatprep.subr.mxu0 0.0
    %1277 = vmatpush1.msra.mxu0 %v1251
    %1278 = vmatprep.subr.mxu0 0.0
    %1279 = vmatpush1.msra.mxu0 %v1252
    %1280 = vmatprep.subr.mxu0 0.0
    %1281 = vmatpush1.msra.mxu0 %v1253
    %1282 = vmatprep.subr.mxu0 0.0
    %1283 = vmatpush1.msra.mxu0 %v1254
    %1284 = vmatprep.subr.mxu0 0.0
    %1285 = vmatpush1.msra.mxu0 %v1255
    %1286 = vmatprep.subr.mxu0 0.0
    %1287 = vmatpush1.msra.mxu0 %v1256
    %1288 = vmatprep.subr.mxu0 0.0
    %1289 = vmatpush1.msra.mxu0 %v1257
    %1290 = vmatprep.subr.mxu0 0.0
    %1291 = vmatpush1.msra.mxu0 0.0
    %1292 = vmatprep.subr.mxu0 0.0
    %1293 = vmatpush1.msra.mxu0 0.0
    %1294 = vmatprep.subr.mxu0 0.0
    %1295 = vmatpush1.msra.mxu0 0.0
    %1296 = vmatprep.subr.mxu0 0.0
    %1297 = vmatpush1.msra.mxu0 0.0
    %1298 = vmatprep.subr.mxu0 0.0
    %1299 = vmatpush1.msra.mxu0 0.0
    %1300 = vmatprep.subr.mxu0 0.0
    %1301 = vmatpush1.msra.mxu0 0.0
    %1302 = vmatprep.subr.mxu0 0.0
    %1303 = vmatpush1.msra.mxu0 0.0
    %1304 = vmatprep.subr.mxu0 0.0
    %1305 = vmatpush1.msra.mxu0 0.0
    %1306 = vmatprep.subr.mxu0 0.0
    %1307 = vmatpush1.msra.mxu0 0.0
    %1308 = vmatprep.subr.mxu0 0.0
    %1309 = vmatpush1.msra.mxu0 0.0
    %1310 = vmatprep.subr.mxu0 0.0
    %1311 = vmatpush1.msra.mxu0 0.0
    %1312 = vmatprep.subr.mxu0 0.0
    %1313 = vmatpush1.msra.mxu0 0.0
    %1314 = vmatprep.subr.mxu0 0.0
    %1315 = vmatpush1.msra.mxu0 0.0
    %1316 = vmatprep.subr.mxu0 0.0
    %1317 = vmatpush1.msra.mxu0 0.0
    %1318 = vmatprep.subr.mxu0 0.0
    %1319 = vmatpush1.msra.mxu0 0.0
    %1320 = vmatprep.subr.mxu0 0.0
    %1321 = vmatpush1.msra.mxu0 0.0
    %1322 = vmatprep.mubr.f32.mxu0 0.0
    %1323 = vmatmul.mubr.f32.gmra.mrb[0].mxu0 %v988
    %v1324 = vpop.f32.mrb[0].mxu0
    %v1325 = vadd.f32 0.0, %v1324
    %v1326 = vpop.f32.mrb[0].mxu0
    %1327 = vmatprep.mubr.f32.mxu0 0.0
    %1328 = vmatmul.mubr.f32.gmra.mrb[0].mxu0 %v989
    %v1329 = vpop.f32.mrb[0].mxu0
    %v1330 = vadd.f32 0.0, %v1329
    %v1331 = vpop.f32.mrb[0].mxu0
    %1332 = vmatprep.mubr.f32.mxu0 0.0
    %1333 = vmatmul.mubr.f32.gmra.mrb[0].mxu0 %v990
    %v1334 = vpop.f32.mrb[0].mxu0
    %v1335 = vadd.f32 0.0, %v1334
    %v1336 = vpop.f32.mrb[0].mxu0
    %1337 = vmatprep.mubr.f32.mxu0 0.0
    %1338 = vmatmul.mubr.f32.gmra.mrb[0].mxu0 %v991
    %v1339 = vpop.f32.mrb[0].mxu0
    %v1340 = vadd.f32 0.0, %v1339
    %v1341 = vpop.f32.mrb[0].mxu0
    %1342 = vdwg.mxu0
    %1343 = vmatprep.subr.mxu0 0.0
    %1344 = vmatpush1.msra.mxu0 %v1325
    %1345 = vmatprep.subr.mxu0 0.0
    %1346 = vmatpush1.msra.mxu0 %v1330
    %1347 = vmatprep.subr.mxu0 0.0
    %1348 = vmatpush1.msra.mxu0 %v1335
    %1349 = vmatprep.subr.mxu0 0.0
    %1350 = vmatpush1.msra.mxu0 %v1340
    %1351 = vmatprep.subr.mxu0 0.0
    %1352 = vmatpush1.msra.mxu0 0.0
    %1353 = vmatprep.subr.mxu0 0.0
    %1354 = vmatpush1.msra.mxu0 0.0
    %1355 = vmatprep.subr.mxu0 0.0
    %1356 = vmatpush1.msra.mxu0 0.0
    %1357 = vmatprep.subr.mxu0 0.0
    %1358 = vmatpush1.msra.mxu0 0.0
    %1359 = vmatprep.subr.mxu0 0.0
    %1360 = vmatpush1.msra.mxu0 0.0
    %1361 = vmatprep.subr.mxu0 0.0
    %1362 = vmatpush1.msra.mxu0 0.0
    %1363 = vmatprep.subr.mxu0 0.0
    %1364 = vmatpush1.msra.mxu0 0.0
    %1365 = vmatprep.subr.mxu0 0.0
    %1366 = vmatpush1.msra.mxu0 0.0
    %1367 = vmatprep.subr.mxu0 0.0
    %1368 = vmatpush1.msra.mxu0 0.0
    %1369 = vmatprep.subr.mxu0 0.0
    %1370 = vmatpush1.msra.mxu0 0.0
    %1371 = vmatprep.subr.mxu0 0.0
    %1372 = vmatpush1.msra.mxu0 0.0
    %1373 = vmatprep.subr.mxu0 0.0
    %1374 = vmatpush1.msra.mxu0 0.0
    %1375 = vmatprep.subr.mxu0 0.0
    %1376 = vmatpush1.msra.mxu0 0.0
    %1377 = vmatprep.subr.mxu0 0.0
    %1378 = vmatpush1.msra.mxu0 0.0
    %1379 = vmatprep.subr.mxu0 0.0
    %1380 = vmatpush1.msra.mxu0 0.0
    %1381 = vmatprep.subr.mxu0 0.0
    %1382 = vmatpush1.msra.mxu0 0.0
    %1383 = vmatprep.subr.mxu0 0.0
    %1384 = vmatpush1.msra.mxu0 0.0
    %1385 = vmatprep.subr.mxu0 0.0
    %1386 = vmatpush1.msra.mxu0 0.0
    %1387 = vmatprep.subr.mxu0 0.0
    %1388 = vmatpush1.msra.mxu0 0.0
    %1389 = vmatprep.subr.mxu0 0.0
    %1390 = vmatpush1.msra.mxu0 0.0
    %1391 = vmatprep.subr.mxu0 0.0
    %1392 = vmatpush1.msra.mxu0 0.0
    %1393 = vmatprep.subr.mxu0 0.0
    %1394 = vmatpush1.msra.mxu0 0.0
    %1395 = vmatprep.subr.mxu0 0.0
    %1396 = vmatpush1.msra.mxu0 0.0
    %1397 = vmatprep.subr.mxu0 0.0
    %1398 = vmatpush1.msra.mxu0 0.0
    %1399 = vmatprep.subr.mxu0 0.0
    %1400 = vmatpush1.msra.mxu0 0.0
    %1401 = vmatprep.subr.mxu0 0.0
    %1402 = vmatpush1.msra.mxu0 0.0
    %1403 = vmatprep.subr.mxu0 0.0
    %1404 = vmatpush1.msra.mxu0 0.0
    %1405 = vmatprep.subr.mxu0 0.0
    %1406 = vmatpush1.msra.mxu0 0.0
    %1407 = vmatprep.mubr.f32.mxu0 0.0
    %1408 = vmatmul.mubr.f32.gmra.mrb[0].mxu0 %v440
    %v1409 = vpop.f32.mrb[0].mxu0
    %v1410 = vadd.f32 0.0, %v1409
    %v1411 = vpop.f32.mrb[0].mxu0
    %1412 = vmatprep.mubr.f32.mxu0 0.0
    %1413 = vmatmul.mubr.f32.gmra.mrb[0].mxu0 %v443
    %v1414 = vpop.f32.mrb[0].mxu0
    %v1415 = vadd.f32 0.0, %v1414
    %v1416 = vpop.f32.mrb[0].mxu0
    %1417 = vmatprep.mubr.f32.mxu0 0.0
    %1418 = vmatmul.mubr.f32.gmra.mrb[0].mxu0 %v446
    %v1419 = vpop.f32.mrb[0].mxu0
    %v1420 = vadd.f32 0.0, %v1419
    %v1421 = vpop.f32.mrb[0].mxu0
    %1422 = vmatprep.mubr.f32.mxu0 0.0
    %1423 = vmatmul.mubr.f32.gmra.mrb[0].mxu0 %v449
    %v1424 = vpop.f32.mrb[0].mxu0
    %v1425 = vadd.f32 0.0, %v1424
    %v1426 = vpop.f32.mrb[0].mxu0
    %1427 = vdwg.mxu0
    %1428 = vmatprep.subr.mxu0 0.0
    %1429 = vmatpush1.msra.mxu0 %v1226
    %1430 = vmatprep.subr.mxu0 0.0
    %1431 = vmatpush1.msra.mxu0 %v1227
    %1432 = vmatprep.subr.mxu0 0.0
    %1433 = vmatpush1.msra.mxu0 %v1228
    %1434 = vmatprep.subr.mxu0 0.0
    %1435 = vmatpush1.msra.mxu0 %v1229
    %1436 = vmatprep.subr.mxu0 0.0
    %1437 = vmatpush1.msra.mxu0 %v1230
    %1438 = vmatprep.subr.mxu0 0.0
    %1439 = vmatpush1.msra.mxu0 %v1231
    %1440 = vmatprep.subr.mxu0 0.0
    %1441 = vmatpush1.msra.mxu0 %v1232
    %1442 = vmatprep.subr.mxu0 0.0
    %1443 = vmatpush1.msra.mxu0 %v1233
    %1444 = vmatprep.subr.mxu0 0.0
    %1445 = vmatpush1.msra.mxu0 %v1234
    %1446 = vmatprep.subr.mxu0 0.0
    %1447 = vmatpush1.msra.mxu0 %v1235
    %1448 = vmatprep.subr.mxu0 0.0
    %1449 = vmatpush1.msra.mxu0 %v1236
    %1450 = vmatprep.subr.mxu0 0.0
    %1451 = vmatpush1.msra.mxu0 %v1237
    %1452 = vmatprep.subr.mxu0 0.0
    %1453 = vmatpush1.msra.mxu0 %v1238
    %1454 = vmatprep.subr.mxu0 0.0
    %1455 = vmatpush1.msra.mxu0 %v1239
    %1456 = vmatprep.subr.mxu0 0.0
    %1457 = vmatpush1.msra.mxu0 %v1240
    %1458 = vmatprep.subr.mxu0 0.0
    %1459 = vmatpush1.msra.mxu0 %v1241
    %1460 = vmatprep.subr.mxu0 0.0
    %1461 = vmatpush1.msra.mxu0 0.0
    %1462 = vmatprep.subr.mxu0 0.0
    %1463 = vmatpush1.msra.mxu0 0.0
    %1464 = vmatprep.subr.mxu0 0.0
    %1465 = vmatpush1.msra.mxu0 0.0
    %1466 = vmatprep.subr.mxu0 0.0
    %1467 = vmatpush1.msra.mxu0 0.0
    %1468 = vmatprep.subr.mxu0 0.0
    %1469 = vmatpush1.msra.mxu0 0.0
    %1470 = vmatprep.subr.mxu0 0.0
    %1471 = vmatpush1.msra.mxu0 0.0
    %1472 = vmatprep.subr.mxu0 0.0
    %1473 = vmatpush1.msra.mxu0 0.0
    %1474 = vmatprep.subr.mxu0 0.0
    %1475 = vmatpush1.msra.mxu0 0.0
    %1476 = vmatprep.subr.mxu0 0.0
    %1477 = vmatpush1.msra.mxu0 0.0
    %1478 = vmatprep.subr.mxu0 0.0
    %1479 = vmatpush1.msra.mxu0 0.0
    %1480 = vmatprep.subr.mxu0 0.0
    %1481 = vmatpush1.msra.mxu0 0.0
    %1482 = vmatprep.subr.mxu0 0.0
    %1483 = vmatpush1.msra.mxu0 0.0
    %1484 = vmatprep.subr.mxu0 0.0
    %1485 = vmatpush1.msra.mxu0 0.0
    %1486 = vmatprep.subr.mxu0 0.0
    %1487 = vmatpush1.msra.mxu0 0.0
    %1488 = vmatprep.subr.mxu0 0.0
    %1489 = vmatpush1.msra.mxu0 0.0
    %1490 = vmatprep.subr.mxu0 0.0
    %1491 = vmatpush1.msra.mxu0 0.0
    %1492 = vmatprep.mubr.f32.mxu0 0.0
    %1493 = vmatmul.mubr.f32.gmra.mrb[0].mxu0 %v988
    %v1494 = vpop.f32.mrb[0].mxu0
    %v1495 = vadd.f32 %v1410, %v1494
    %v1496 = vpop.f32.mrb[0].mxu0
    %1497 = vmatprep.mubr.f32.mxu0 0.0
    %1498 = vmatmul.mubr.f32.gmra.mrb[0].mxu0 %v989
    %v1499 = vpop.f32.mrb[0].mxu0
    %v1500 = vadd.f32 %v1415, %v1499
    %v1501 = vpop.f32.mrb[0].mxu0
    %1502 = vmatprep.mubr.f32.mxu0 0.0
    %1503 = vmatmul.mubr.f32.gmra.mrb[0].mxu0 %v990
    %v1504 = vpop.f32.mrb[0].mxu0
    %v1505 = vadd.f32 %v1420, %v1504
    %v1506 = vpop.f32.mrb[0].mxu0
    %1507 = vmatprep.mubr.f32.mxu0 0.0
    %1508 = vmatmul.mubr.f32.gmra.mrb[0].mxu0 %v991
    %v1509 = vpop.f32.mrb[0].mxu0
    %v1510 = vadd.f32 %v1425, %v1509
    %v1511 = vpop.f32.mrb[0].mxu0
    %1512 = vdwg.mxu0
    %v1513 = vld [vmem:[#allocation16] sm:$0xff]
    %v1514 = vld [vmem:[#allocation16 + $0x8] sm:$0xff]
    %v1515 = vld [vmem:[#allocation16 + $0x10] sm:$0xff]
    %v1516 = vld [vmem:[#allocation16 + $0x18] sm:$0xff]
    %v1517 = vld [vmem:[#allocation16 + $0x20] sm:$0xff]
    %v1518 = vld [vmem:[#allocation16 + $0x28] sm:$0xff]
    %v1519 = vld [vmem:[#allocation16 + $0x30] sm:$0xff]
    %v1520 = vld [vmem:[#allocation16 + $0x38] sm:$0xff]
    %v1521 = vld [vmem:[#allocation16 + $0x40] sm:$0xff]
    %v1522 = vld [vmem:[#allocation16 + $0x48] sm:$0xff]
    %v1523 = vld [vmem:[#allocation16 + $0x50] sm:$0xff]
    %v1524 = vld [vmem:[#allocation16 + $0x58] sm:$0xff]
    %v1525 = vld [vmem:[#allocation16 + $0x60] sm:$0xff]
    %v1526 = vld [vmem:[#allocation16 + $0x68] sm:$0xff]
    %v1527 = vld [vmem:[#allocation16 + $0x70] sm:$0xff]
    %v1528 = vld [vmem:[#allocation16 + $0x78] sm:$0xff]
    %1529 = vmatprep.subr.mxu0 0.0
    %1530 = vmatpush1.msra.mxu0 %v1513
    %1531 = vmatprep.subr.mxu0 0.0
    %1532 = vmatpush1.msra.mxu0 %v1514
    %1533 = vmatprep.subr.mxu0 0.0
    %1534 = vmatpush1.msra.mxu0 %v1515
    %1535 = vmatprep.subr.mxu0 0.0
    %1536 = vmatpush1.msra.mxu0 %v1516
    %1537 = vmatprep.subr.mxu0 0.0
    %1538 = vmatpush1.msra.mxu0 %v1517
    %1539 = vmatprep.subr.mxu0 0.0
    %1540 = vmatpush1.msra.mxu0 %v1518
    %1541 = vmatprep.subr.mxu0 0.0
    %1542 = vmatpush1.msra.mxu0 %v1519
    %1543 = vmatprep.subr.mxu0 0.0
    %1544 = vmatpush1.msra.mxu0 %v1520
    %1545 = vmatprep.subr.mxu0 0.0
    %1546 = vmatpush1.msra.mxu0 %v1521
    %1547 = vmatprep.subr.mxu0 0.0
    %1548 = vmatpush1.msra.mxu0 %v1522
    %1549 = vmatprep.subr.mxu0 0.0
    %1550 = vmatpush1.msra.mxu0 %v1523
    %1551 = vmatprep.subr.mxu0 0.0
    %1552 = vmatpush1.msra.mxu0 %v1524
    %1553 = vmatprep.subr.mxu0 0.0
    %1554 = vmatpush1.msra.mxu0 %v1525
    %1555 = vmatprep.subr.mxu0 0.0
    %1556 = vmatpush1.msra.mxu0 %v1526
    %1557 = vmatprep.subr.mxu0 0.0
    %1558 = vmatpush1.msra.mxu0 %v1527
    %1559 = vmatprep.subr.mxu0 0.0
    %1560 = vmatpush1.msra.mxu0 %v1528
    %1561 = vmatprep.subr.mxu0 0.0
    %1562 = vmatpush1.msra.mxu0 0.0
    %1563 = vmatprep.subr.mxu0 0.0
    %1564 = vmatpush1.msra.mxu0 0.0
    %1565 = vmatprep.subr.mxu0 0.0
    %1566 = vmatpush1.msra.mxu0 0.0
    %1567 = vmatprep.subr.mxu0 0.0
    %1568 = vmatpush1.msra.mxu0 0.0
    %1569 = vmatprep.subr.mxu0 0.0
    %1570 = vmatpush1.msra.mxu0 0.0
    %1571 = vmatprep.subr.mxu0 0.0
    %1572 = vmatpush1.msra.mxu0 0.0
    %1573 = vmatprep.subr.mxu0 0.0
    %1574 = vmatpush1.msra.mxu0 0.0
    %1575 = vmatprep.subr.mxu0 0.0
    %1576 = vmatpush1.msra.mxu0 0.0
    %1577 = vmatprep.subr.mxu0 0.0
    %1578 = vmatpush1.msra.mxu0 0.0
    %1579 = vmatprep.subr.mxu0 0.0
    %1580 = vmatpush1.msra.mxu0 0.0
    %1581 = vmatprep.subr.mxu0 0.0
    %1582 = vmatpush1.msra.mxu0 0.0
    %1583 = vmatprep.subr.mxu0 0.0
    %1584 = vmatpush1.msra.mxu0 0.0
    %1585 = vmatprep.subr.mxu0 0.0
    %1586 = vmatpush1.msra.mxu0 0.0
    %1587 = vmatprep.subr.mxu0 0.0
    %1588 = vmatpush1.msra.mxu0 0.0
    %1589 = vmatprep.subr.mxu0 0.0
    %1590 = vmatpush1.msra.mxu0 0.0
    %1591 = vmatprep.subr.mxu0 0.0
    %1592 = vmatpush1.msra.mxu0 0.0
    %1593 = vmatprep.mubr.f32.mxu0 0.0
    %1594 = vmatmul.mubr.f32.gmra.mrb[0].mxu0 %v988
    %v1595 = vpop.f32.mrb[0].mxu0
    %v1596 = vadd.f32 0.0, %v1595
    %v1597 = vpop.f32.mrb[0].mxu0
    %1598 = vmatprep.mubr.f32.mxu0 0.0
    %1599 = vmatmul.mubr.f32.gmra.mrb[0].mxu0 %v989
    %v1600 = vpop.f32.mrb[0].mxu0
    %v1601 = vadd.f32 0.0, %v1600
    %v1602 = vpop.f32.mrb[0].mxu0
    %1603 = vmatprep.mubr.f32.mxu0 0.0
    %1604 = vmatmul.mubr.f32.gmra.mrb[0].mxu0 %v990
    %v1605 = vpop.f32.mrb[0].mxu0
    %v1606 = vadd.f32 0.0, %v1605
    %v1607 = vpop.f32.mrb[0].mxu0
    %1608 = vmatprep.mubr.f32.mxu0 0.0
    %1609 = vmatmul.mubr.f32.gmra.mrb[0].mxu0 %v991
    %v1610 = vpop.f32.mrb[0].mxu0
    %v1611 = vadd.f32 0.0, %v1610
    %v1612 = vpop.f32.mrb[0].mxu0
    %1613 = vdwg.mxu0
    %1614 = vmatprep.subr.mxu0 0.0
    %1615 = vmatpush1.msra.mxu0 %v1596
    %1616 = vmatprep.subr.mxu0 0.0
    %1617 = vmatpush1.msra.mxu0 %v1601
    %1618 = vmatprep.subr.mxu0 0.0
    %1619 = vmatpush1.msra.mxu0 %v1606
    %1620 = vmatprep.subr.mxu0 0.0
    %1621 = vmatpush1.msra.mxu0 %v1611
    %1622 = vmatprep.subr.mxu0 0.0
    %1623 = vmatpush1.msra.mxu0 0.0
    %1624 = vmatprep.subr.mxu0 0.0
    %1625 = vmatpush1.msra.mxu0 0.0
    %1626 = vmatprep.subr.mxu0 0.0
    %1627 = vmatpush1.msra.mxu0 0.0
    %1628 = vmatprep.subr.mxu0 0.0
    %1629 = vmatpush1.msra.mxu0 0.0
    %1630 = vmatprep.subr.mxu0 0.0
    %1631 = vmatpush1.msra.mxu0 0.0
    %1632 = vmatprep.subr.mxu0 0.0
    %1633 = vmatpush1.msra.mxu0 0.0
    %1634 = vmatprep.subr.mxu0 0.0
    %1635 = vmatpush1.msra.mxu0 0.0
    %1636 = vmatprep.subr.mxu0 0.0
    %1637 = vmatpush1.msra.mxu0 0.0
    %1638 = vmatprep.subr.mxu0 0.0
    %1639 = vmatpush1.msra.mxu0 0.0
    %1640 = vmatprep.subr.mxu0 0.0
    %1641 = vmatpush1.msra.mxu0 0.0
    %1642 = vmatprep.subr.mxu0 0.0
    %1643 = vmatpush1.msra.mxu0 0.0
    %1644 = vmatprep.subr.mxu0 0.0
    %1645 = vmatpush1.msra.mxu0 0.0
    %1646 = vmatprep.subr.mxu0 0.0
    %1647 = vmatpush1.msra.mxu0 0.0
    %1648 = vmatprep.subr.mxu0 0.0
    %1649 = vmatpush1.msra.mxu0 0.0
    %1650 = vmatprep.subr.mxu0 0.0
    %1651 = vmatpush1.msra.mxu0 0.0
    %1652 = vmatprep.subr.mxu0 0.0
    %1653 = vmatpush1.msra.mxu0 0.0
    %1654 = vmatprep.subr.mxu0 0.0
    %1655 = vmatpush1.msra.mxu0 0.0
    %1656 = vmatprep.subr.mxu0 0.0
    %1657 = vmatpush1.msra.mxu0 0.0
    %1658 = vmatprep.subr.mxu0 0.0
    %1659 = vmatpush1.msra.mxu0 0.0
    %1660 = vmatprep.subr.mxu0 0.0
    %1661 = vmatpush1.msra.mxu0 0.0
    %1662 = vmatprep.subr.mxu0 0.0
    %1663 = vmatpush1.msra.mxu0 0.0
    %1664 = vmatprep.subr.mxu0 0.0
    %1665 = vmatpush1.msra.mxu0 0.0
    %1666 = vmatprep.subr.mxu0 0.0
    %1667 = vmatpush1.msra.mxu0 0.0
    %1668 = vmatprep.subr.mxu0 0.0
    %1669 = vmatpush1.msra.mxu0 0.0
    %1670 = vmatprep.subr.mxu0 0.0
    %1671 = vmatpush1.msra.mxu0 0.0
    %1672 = vmatprep.subr.mxu0 0.0
    %1673 = vmatpush1.msra.mxu0 0.0
    %1674 = vmatprep.subr.mxu0 0.0
    %1675 = vmatpush1.msra.mxu0 0.0
    %1676 = vmatprep.subr.mxu0 0.0
    %1677 = vmatpush1.msra.mxu0 0.0
    %1678 = vmatprep.mubr.f32.mxu0 0.0
    %1679 = vmatmul.mubr.f32.gmra.mrb[0].mxu0 %v634
    %v1680 = vpop.f32.mrb[0].mxu0
    %v1681 = vadd.f32 0.0, %v1680
    %v1682 = vpop.f32.mrb[0].mxu0
    %1683 = vmatprep.mubr.f32.mxu0 0.0
    %1684 = vmatmul.mubr.f32.gmra.mrb[0].mxu0 %v637
    %v1685 = vpop.f32.mrb[0].mxu0
    %v1686 = vadd.f32 0.0, %v1685
    %v1687 = vpop.f32.mrb[0].mxu0
    %1688 = vmatprep.mubr.f32.mxu0 0.0
    %1689 = vmatmul.mubr.f32.gmra.mrb[0].mxu0 %v640
    %v1690 = vpop.f32.mrb[0].mxu0
    %v1691 = vadd.f32 0.0, %v1690
    %v1692 = vpop.f32.mrb[0].mxu0
    %1693 = vmatprep.mubr.f32.mxu0 0.0
    %1694 = vmatmul.mubr.f32.gmra.mrb[0].mxu0 %v643
    %v1695 = vpop.f32.mrb[0].mxu0
    %v1696 = vadd.f32 0.0, %v1695
    %v1697 = vpop.f32.mrb[0].mxu0
    %1698 = vdwg.mxu0
    %v1699 = vadd.f32 %v1495, %v1681
    %v1700 = vadd.f32 %v1500, %v1686
    %v1701 = vadd.f32 %v1505, %v1691
    %v1702 = vadd.f32 %v1510, %v1696
    %v1703 = vld [vmem:[%s13] sm:$0x1]
    %v1705 = vlaneseq
    %v1706 = vshrl.u32 %v1705, 7
    %v1707 = vsub.s32 0, %v1706
    %v1708 = vrot.slane %v1703, %v1707
    %v1710 = vadd.f32 %v1699, %v1708
    %v1711 = vadd.f32 %v1700, %v1708
    %v1712 = vadd.f32 %v1701, %v1708
    %v1713 = vadd.f32 %v1702, %v1708
    %v1714 = vld [vmem:[%s14] sm:$0x1]
    %v1715 = vld [vmem:[%s15] sm:$0x1]
    %1716 = vmatprep.subr.mxu0 0.0
    %1717 = vmatpush1.msra.mxu0 %v211
    %1718 = vmatprep.subr.mxu0 0.0
    %1719 = vmatpush1.msra.mxu0 %v212
    %1720 = vmatprep.subr.mxu0 0.0
    %1721 = vmatpush1.msra.mxu0 %v213
    %1722 = vmatprep.subr.mxu0 0.0
    %1723 = vmatpush1.msra.mxu0 %v214
    %1724 = vmatprep.subr.mxu0 0.0
    %1725 = vmatpush1.msra.mxu0 %v215
    %1726 = vmatprep.subr.mxu0 0.0
    %1727 = vmatpush1.msra.mxu0 %v216
    %1728 = vmatprep.subr.mxu0 0.0
    %1729 = vmatpush1.msra.mxu0 %v217
    %1730 = vmatprep.subr.mxu0 0.0
    %1731 = vmatpush1.msra.mxu0 %v218
    %1732 = vmatprep.subr.mxu0 0.0
    %1733 = vmatpush1.msra.mxu0 %v219
    %1734 = vmatprep.subr.mxu0 0.0
    %1735 = vmatpush1.msra.mxu0 %v220
    %1736 = vmatprep.subr.mxu0 0.0
    %1737 = vmatpush1.msra.mxu0 %v221
    %1738 = vmatprep.subr.mxu0 0.0
    %1739 = vmatpush1.msra.mxu0 %v222
    %1740 = vmatprep.subr.mxu0 0.0
    %1741 = vmatpush1.msra.mxu0 %v223
    %1742 = vmatprep.subr.mxu0 0.0
    %1743 = vmatpush1.msra.mxu0 %v224
    %1744 = vmatprep.subr.mxu0 0.0
    %1745 = vmatpush1.msra.mxu0 %v225
    %1746 = vmatprep.subr.mxu0 0.0
    %1747 = vmatpush1.msra.mxu0 %v226
    %1748 = vmatprep.subr.mxu0 0.0
    %1749 = vmatpush1.msra.mxu0 0.0
    %1750 = vmatprep.subr.mxu0 0.0
    %1751 = vmatpush1.msra.mxu0 0.0
    %1752 = vmatprep.subr.mxu0 0.0
    %1753 = vmatpush1.msra.mxu0 0.0
    %1754 = vmatprep.subr.mxu0 0.0
    %1755 = vmatpush1.msra.mxu0 0.0
    %1756 = vmatprep.subr.mxu0 0.0
    %1757 = vmatpush1.msra.mxu0 0.0
    %1758 = vmatprep.subr.mxu0 0.0
    %1759 = vmatpush1.msra.mxu0 0.0
    %1760 = vmatprep.subr.mxu0 0.0
    %1761 = vmatpush1.msra.mxu0 0.0
    %1762 = vmatprep.subr.mxu0 0.0
    %1763 = vmatpush1.msra.mxu0 0.0
    %1764 = vmatprep.subr.mxu0 0.0
    %1765 = vmatpush1.msra.mxu0 0.0
    %1766 = vmatprep.subr.mxu0 0.0
    %1767 = vmatpush1.msra.mxu0 0.0
    %1768 = vmatprep.subr.mxu0 0.0
    %1769 = vmatpush1.msra.mxu0 0.0
    %1770 = vmatprep.subr.mxu0 0.0
    %1771 = vmatpush1.msra.mxu0 0.0
    %1772 = vmatprep.subr.mxu0 0.0
    %1773 = vmatpush1.msra.mxu0 0.0
    %1774 = vmatprep.subr.mxu0 0.0
    %1775 = vmatpush1.msra.mxu0 0.0
    %1776 = vmatprep.subr.mxu0 0.0
    %1777 = vmatpush1.msra.mxu0 0.0
    %1778 = vmatprep.subr.mxu0 0.0
    %1779 = vmatpush1.msra.mxu0 0.0
    %1780 = vmatprep.mubr.f32.mxu0 0.0
    %1781 = vmatmul.mubr.f32.gmra.mrb[0].mxu0 %v1710
    %v1782 = vpop.f32.mrb[0].mxu0
    %v1783 = vadd.f32 0.0, %v1782
    %v1784 = vpop.f32.mrb[0].mxu0
    %1785 = vmatprep.mubr.f32.mxu0 0.0
    %1786 = vmatmul.mubr.f32.gmra.mrb[0].mxu0 %v1711
    %v1787 = vpop.f32.mrb[0].mxu0
    %v1788 = vadd.f32 0.0, %v1787
    %v1789 = vpop.f32.mrb[0].mxu0
    %1790 = vmatprep.mubr.f32.mxu0 0.0
    %1791 = vmatmul.mubr.f32.gmra.mrb[0].mxu0 %v1712
    %v1792 = vpop.f32.mrb[0].mxu0
    %v1793 = vadd.f32 0.0, %v1792
    %v1794 = vpop.f32.mrb[0].mxu0
    %1795 = vmatprep.mubr.f32.mxu0 0.0
    %1796 = vmatmul.mubr.f32.gmra.mrb[0].mxu0 %v1713
    %v1797 = vpop.f32.mrb[0].mxu0
    %v1798 = vadd.f32 0.0, %v1797
    %v1799 = vpop.f32.mrb[0].mxu0
    %1800 = vdwg.mxu0
    %v1801 = vadd.f32 %v1783, %v1788
    %v1802 = vadd.f32 %v1801, %v1793
    %v1803 = vadd.f32 %v1802, %v1798
    %v1804 = vrot.slane %v1803, 4
    %v1805 = vadd.f32 %v1803, %v1804
    %v1806 = vrot.slane %v1805, 2
    %v1807 = vadd.f32 %v1805, %v1806
    %v1808 = vrot.slane %v1807, 1
    %v1809 = vadd.f32 %v1807, %v1808
    %v1810 = vmul.f32 %v1809, 0.001953125
    %v1811 = vmul.f32 %v1710, %v1710
    %v1812 = vmul.f32 %v1711, %v1711
    %v1813 = vmul.f32 %v1712, %v1712
    %v1814 = vmul.f32 %v1713, %v1713
    %1815 = vmatprep.subr.mxu0 0.0
    %1816 = vmatpush1.msra.mxu0 %v211
    %1817 = vmatprep.subr.mxu0 0.0
    %1818 = vmatpush1.msra.mxu0 %v212
    %1819 = vmatprep.subr.mxu0 0.0
    %1820 = vmatpush1.msra.mxu0 %v213
    %1821 = vmatprep.subr.mxu0 0.0
    %1822 = vmatpush1.msra.mxu0 %v214
    %1823 = vmatprep.subr.mxu0 0.0
    %1824 = vmatpush1.msra.mxu0 %v215
    %1825 = vmatprep.subr.mxu0 0.0
    %1826 = vmatpush1.msra.mxu0 %v216
    %1827 = vmatprep.subr.mxu0 0.0
    %1828 = vmatpush1.msra.mxu0 %v217
    %1829 = vmatprep.subr.mxu0 0.0
    %1830 = vmatpush1.msra.mxu0 %v218
    %1831 = vmatprep.subr.mxu0 0.0
    %1832 = vmatpush1.msra.mxu0 %v219
    %1833 = vmatprep.subr.mxu0 0.0
    %1834 = vmatpush1.msra.mxu0 %v220
    %1835 = vmatprep.subr.mxu0 0.0
    %1836 = vmatpush1.msra.mxu0 %v221
    %1837 = vmatprep.subr.mxu0 0.0
    %1838 = vmatpush1.msra.mxu0 %v222
    %1839 = vmatprep.subr.mxu0 0.0
    %1840 = vmatpush1.msra.mxu0 %v223
    %1841 = vmatprep.subr.mxu0 0.0
    %1842 = vmatpush1.msra.mxu0 %v224
    %1843 = vmatprep.subr.mxu0 0.0
    %1844 = vmatpush1.msra.mxu0 %v225
    %1845 = vmatprep.subr.mxu0 0.0
    %1846 = vmatpush1.msra.mxu0 %v226
    %1847 = vmatprep.subr.mxu0 0.0
    %1848 = vmatpush1.msra.mxu0 0.0
    %1849 = vmatprep.subr.mxu0 0.0
    %1850 = vmatpush1.msra.mxu0 0.0
    %1851 = vmatprep.subr.mxu0 0.0
    %1852 = vmatpush1.msra.mxu0 0.0
    %1853 = vmatprep.subr.mxu0 0.0
    %1854 = vmatpush1.msra.mxu0 0.0
    %1855 = vmatprep.subr.mxu0 0.0
    %1856 = vmatpush1.msra.mxu0 0.0
    %1857 = vmatprep.subr.mxu0 0.0
    %1858 = vmatpush1.msra.mxu0 0.0
    %1859 = vmatprep.subr.mxu0 0.0
    %1860 = vmatpush1.msra.mxu0 0.0
    %1861 = vmatprep.subr.mxu0 0.0
    %1862 = vmatpush1.msra.mxu0 0.0
    %1863 = vmatprep.subr.mxu0 0.0
    %1864 = vmatpush1.msra.mxu0 0.0
    %1865 = vmatprep.subr.mxu0 0.0
    %1866 = vmatpush1.msra.mxu0 0.0
    %1867 = vmatprep.subr.mxu0 0.0
    %1868 = vmatpush1.msra.mxu0 0.0
    %1869 = vmatprep.subr.mxu0 0.0
    %1870 = vmatpush1.msra.mxu0 0.0
    %1871 = vmatprep.subr.mxu0 0.0
    %1872 = vmatpush1.msra.mxu0 0.0
    %1873 = vmatprep.subr.mxu0 0.0
    %1874 = vmatpush1.msra.mxu0 0.0
    %1875 = vmatprep.subr.mxu0 0.0
    %1876 = vmatpush1.msra.mxu0 0.0
    %1877 = vmatprep.subr.mxu0 0.0
    %1878 = vmatpush1.msra.mxu0 0.0
    %1879 = vmatprep.mubr.f32.mxu0 0.0
    %1880 = vmatmul.mubr.f32.gmra.mrb[0].mxu0 %v1811
    %v1881 = vpop.f32.mrb[0].mxu0
    %v1882 = vadd.f32 0.0, %v1881
    %v1883 = vpop.f32.mrb[0].mxu0
    %1884 = vmatprep.mubr.f32.mxu0 0.0
    %1885 = vmatmul.mubr.f32.gmra.mrb[0].mxu0 %v1812
    %v1886 = vpop.f32.mrb[0].mxu0
    %v1887 = vadd.f32 0.0, %v1886
    %v1888 = vpop.f32.mrb[0].mxu0
    %1889 = vmatprep.mubr.f32.mxu0 0.0
    %1890 = vmatmul.mubr.f32.gmra.mrb[0].mxu0 %v1813
    %v1891 = vpop.f32.mrb[0].mxu0
    %v1892 = vadd.f32 0.0, %v1891
    %v1893 = vpop.f32.mrb[0].mxu0
    %1894 = vmatprep.mubr.f32.mxu0 0.0
    %1895 = vmatmul.mubr.f32.gmra.mrb[0].mxu0 %v1814
    %v1896 = vpop.f32.mrb[0].mxu0
    %v1897 = vadd.f32 0.0, %v1896
    %v1898 = vpop.f32.mrb[0].mxu0
    %1899 = vdwg.mxu0
    %v1900 = vadd.f32 %v1882, %v1887
    %v1901 = vadd.f32 %v1900, %v1892
    %v1902 = vadd.f32 %v1901, %v1897
    %v1903 = vrot.slane %v1902, 4
    %v1904 = vadd.f32 %v1902, %v1903
    %v1905 = vrot.slane %v1904, 2
    %v1906 = vadd.f32 %v1904, %v1905
    %v1907 = vrot.slane %v1906, 1
    %v1908 = vadd.f32 %v1906, %v1907
    %v1909 = vmul.f32 %v1908, 0.001953125
    %v1910 = vmul.f32 %v1810, %v1810
    %v1911 = vsub.f32 %v1909, %v1910
    %v1912 = vsub.f32 %v1710, %v1810
    %v1913 = vsub.f32 %v1711, %v1810
    %v1914 = vsub.f32 %v1712, %v1810
    %v1915 = vsub.f32 %v1713, %v1810
    %v1916 = vadd.f32 %v1911, 1e-05
    %v1917 = vrsqrt.pop %v1916
    %v1918 = vmul.f32 %v1917, %v1714
    %v1919 = vlaneseq
    %v1920 = vshrl.u32 %v1919, 7
    %v1921 = vsub.s32 0, %v1920
    %v1922 = vrot.slane %v1918, %v1921
    %v1923 = vmul.f32 %v1912, %v1922
    %v1924 = vmul.f32 %v1913, %v1922
    %v1925 = vmul.f32 %v1914, %v1922
    %v1926 = vmul.f32 %v1915, %v1922
    %v1928 = vlaneseq
    %v1929 = vshrl.u32 %v1928, 7
    %v1930 = vsub.s32 0, %v1929
    %v1931 = vrot.slane %v1715, %v1930
    %v1933 = vadd.f32 %v1923, %v1931
    %v1934 = vadd.f32 %v1924, %v1931
    %v1935 = vadd.f32 %v1925, %v1931
    %v1936 = vadd.f32 %v1926, %v1931
    %v1937 = vadd.f32 %v1933, %v1222
    %v1938 = vadd.f32 %v1934, %v1223
    %v1939 = vadd.f32 %v1935, %v1224
    %v1940 = vadd.f32 %v1936, %v1225
    %v1941 = vsub.f32 0.0, %v1937
    %v1942 = vsub.f32 0.0, %v1938
    %v1943 = vsub.f32 0.0, %v1939
    %v1944 = vsub.f32 0.0, %v1940
    %v1945 = vmul.f32 %v1941, 1.442695
    %v1946 = vpow.pop %v1945
    %v1947 = vmul.f32 %v1942, 1.442695
    %v1948 = vpow.pop %v1947
    %v1949 = vmul.f32 %v1943, 1.442695
    %v1950 = vpow.pop %v1949
    %v1951 = vmul.f32 %v1944, 1.442695
    %v1952 = vpow.pop %v1951
    %v1953 = vadd.f32 %v1946, 1.0
    %v1954 = vadd.f32 %v1948, 1.0
    %v1955 = vadd.f32 %v1950, 1.0
    %v1956 = vadd.f32 %v1952, 1.0
    %v1957 = vrcp.pop %v1953
    %v1958 = vrcp.pop %v1954
    %v1959 = vrcp.pop %v1955
    %v1960 = vrcp.pop %v1956
    %v1961 = vmul.f32 %v1937, %v1957
    %v1962 = vmul.f32 %v1938, %v1958
    %v1963 = vmul.f32 %v1939, %v1959
    %v1964 = vmul.f32 %v1940, %v1960
    %1965 = vst [vmem:[#allocation19] sm:$0xff] %v1961
    %1966 = vst [vmem:[#allocation19 + $0x8] sm:$0xff] %v1962
    %1967 = vst [vmem:[#allocation19 + $0x10] sm:$0xff] %v1963
    %1968 = vst [vmem:[#allocation19 + $0x18] sm:$0xff] %v1964
    // Predicated region
    $region118: #{tpu_custom_call.1} parent=1 // pred_check
      _
    $region119: #{tpu_custom_call.1} parent=1 // pred_check_branch
      %1970 = sbr.rel (0) target = $region121
    $region120: #{tpu_custom_call.1} parent=1 // pred_region
      %s1972 = ssub.s32 512, 512
      %1973 = vsyncadd [#allocation4], %s1972
      %s1974 = sshll.u32 [#allocation19], 4
      %s1975 = int_to_ptr.vmem [resolvable:$true] %s1974
      %1980 = dma.vmem_to_hbm [thread:$0]  %s1975, 512, %s19, [#allocation4], 128, 128, 8
    $region121: #{tpu_custom_call.1} parent=1 // pred_fallthru
      _
    // Predicated region
    $region122: #{tpu_custom_call.1} parent=1 // pred_check
      _
    $region123: #{tpu_custom_call.1} parent=1 // pred_check_branch
      %1982 = sbr.rel (0) target = $region125
    $region124: #{tpu_custom_call.1} parent=1 // pred_region
      %1983 = dma.done [#allocation4], 512
    $region125: #{tpu_custom_call.1} parent=1 // pred_fallthru
      _
    %1984 = vsyncpa [#allocation3], 1
    %1985 = vsyncpa [#allocation6], 1
    %1986 = vsyncpa [#allocation9], 1
    %1987 = vsyncpa [#allocation12], 1
    %1988 = vsyncpa [#allocation15], 1
    %1989 = vsyncpa [#allocation18], 1
    %1990 = vsyncpa [#allocation4], 1

</llo_original>
